<compile_context>
chip_gen: v7x
topology: tpu7x:2x2x1
jax: 0.10.0
libtpu: 0.0.40
codegen_flags: <defaults>
</compile_context>

<pallas_src>
import functools

import jax
import jax.numpy as jnp
from jax import lax
from jax.experimental import pallas as pl
from jax.experimental.pallas import tpu as pltpu

NUM_HEADS = 4


def multiple_heads_kernel(x_ref, wqkv_ref, wp_ref, bp_ref, o_ref, cat_ref,
                          *, seq_len, bb):
    """One grid step = `bb` batch elements, rows pre-flattened to (bb*T, E).

    x_ref   : (bb*T, E)   activations (native dtype, fed straight to the MXU)
    wqkv_ref: (E, 3E)     fused [Q h0..h3 | K h0..h3 | V h0..h3] projection
    wp_ref  : (E, E)      output projection, pre-transposed (y = cat @ wp + b)
    bp_ref  : (1, E)
    o_ref   : (bb*T, E)
    cat_ref : (bb*T, E)   f32 VMEM scratch holding the concatenated head outputs
    """
    T = seq_len
    _, E = x_ref.shape
    H = E // NUM_HEADS
    scale = jnp.float32(1.0 / (H ** 0.5))

    # One fused projection for all heads and all rows in the block (MXU N = 3E).
    qkv = jnp.dot(x_ref[...], wqkv_ref[...],
                  preferred_element_type=jnp.float32)          # (bb*T, 3E) f32

    # Causal additive mask, computed once and reused by every (batch, head).
    row = lax.broadcasted_iota(jnp.int32, (T, T), 0)
    col = lax.broadcasted_iota(jnp.int32, (T, T), 1)
    addmask = jnp.where(row >= col, 0.0, -1e30).astype(jnp.float32)   # (T, T)

    for b in range(bb):                          # static unroll over batch in block
        r0 = b * T
        qkv_b = qkv[r0:r0 + T, :]                # (T, 3E)
        for h in range(NUM_HEADS):               # static unroll over the 4 heads
            q = qkv_b[:, h * H:(h + 1) * H]                      # (T, H)
            k = qkv_b[:, E + h * H:E + (h + 1) * H]              # (T, H)
            v = qkv_b[:, 2 * E + h * H:2 * E + (h + 1) * H]      # (T, H)

            # q @ k^T without materializing a transpose (contract on H of both).
            s = lax.dot_general(q, k, (((1,), (1,)), ((), ())),
                                preferred_element_type=jnp.float32)   # (T, T)
            s = s * scale + addmask
            s = s - jnp.max(s, axis=-1, keepdims=True)
            p = jnp.exp(s)
            p = p * pl.reciprocal(jnp.sum(p, axis=-1, keepdims=True), approx=True)

            # Slice-write into the concat scratch instead of jnp.concatenate.
            cat_ref[r0:r0 + T, h * H:(h + 1) * H] = jnp.dot(
                p, v, preferred_element_type=jnp.float32)            # (T, H)

    y = jnp.dot(cat_ref[...].astype(wp_ref.dtype), wp_ref[...],
                preferred_element_type=jnp.float32) + bp_ref[0]
    # TODO(synk): nn.Dropout(0.2) is identity in eval mode; training-mode
    #             stochastic dropout (pltpu.prng_*) intentionally omitted.
    o_ref[...] = y.astype(o_ref.dtype)


def pack_params(wq, wk, wv, wp, bp):
    """Fold per-head / PyTorch-layout weights into kernel-friendly layouts.

    Intended to run ONCE at init time (not per forward):
      wq/wk/wv (4, E, H) -> w_qkv (E, 3E), columns [q_h0..q_h3 | k_h0..k_h3 | v_h0..v_h3]
      wp (E, E) PyTorch (out, in) -> wp_t (E, E) so that y = cat @ wp_t + b
      bp (E,) -> (1, E)
    """
    n, E, H = wq.shape
    assert n == NUM_HEADS and E == NUM_HEADS * H
    to_cols = lambda w: jnp.transpose(w, (1, 0, 2)).reshape(E, E)
    w_qkv = jnp.concatenate([to_cols(wq), to_cols(wk), to_cols(wv)], axis=1)
    return w_qkv, wp.T, bp.reshape(1, E)


def _pick_block_batch(B, T, target_rows=256):
    """Choose how many batch elements to process per grid step."""
    bb = max(1, min(B, max(1, target_rows // max(T, 1))))
    while B % bb != 0:
        bb -= 1
    if (bb * T) % 8 != 0:      # keep the block sublane dim legal
        bb = B                 # full-array block is always legal
    return bb


def multiple_heads_forward(x, w_qkv, wp_t, bp2):
    """x: (B, T, E); w_qkv: (E, 3E); wp_t: (E, E); bp2: (1, E)."""
    B, T, E = x.shape
    bb = _pick_block_batch(B, T)
    x2d = x.reshape(B * T, E)               # free leading-dim flatten in XLA

    kernel = functools.partial(multiple_heads_kernel, seq_len=T, bb=bb)
    out2d = pl.pallas_call(
        kernel,
        out_shape=jax.ShapeDtypeStruct((B * T, E), x.dtype),
        grid_spec=pltpu.PrefetchScalarGridSpec(
            num_scalar_prefetch=0,
            grid=(B // bb,),
            in_specs=[
                pl.BlockSpec((bb * T, E), lambda g: (g, 0)),
                pl.BlockSpec((E, 3 * E), lambda g: (0, 0)),
                pl.BlockSpec((E, E), lambda g: (0, 0)),
                pl.BlockSpec((1, E), lambda g: (0, 0)),
            ],
            out_specs=pl.BlockSpec((bb * T, E), lambda g: (g, 0)),
            scratch_shapes=[pltpu.VMEM((bb * T, E), jnp.float32)],
        ),
        compiler_params=pltpu.CompilerParams(
            dimension_semantics=("parallel",),
            vmem_limit_bytes=32 * 1024 * 1024,
        ),
    )(x2d, w_qkv, wp_t, bp2)
    return out2d.reshape(B, T, E)


def reference_forward(x, wq, wk, wv, wp, bp):
    """Pure-JAX reference reproducing the PyTorch forward (eval mode)."""
    B, T, E = x.shape
    H = E // NUM_HEADS
    scale = 1.0 / (H ** 0.5)
    causal = jnp.tril(jnp.ones((T, T), dtype=bool))
    outs = []
    for h in range(NUM_HEADS):
        q = x @ wq[h]
        k = x @ wk[h]
        v = x @ wv[h]
        s = jnp.einsum("btd,bsd->bts", q, k) * scale
        s = jnp.where(causal[None], s, -jnp.inf)
        p = jax.nn.softmax(s, axis=-1)
        outs.append(jnp.einsum("bts,bsd->btd", p, v))
    cat = jnp.concatenate(outs, axis=-1)
    return cat @ wp.T + bp


if __name__ == "__main__":
    B, T, E = 2, 8, 32
    H = E // NUM_HEADS

    key = jax.random.PRNGKey(0)
    kx, kq, kk, kv, kp, kb = jax.random.split(key, 6)

    x = jax.random.normal(kx, (B, T, E), dtype=jnp.float32)
    wq = jax.random.normal(kq, (NUM_HEADS, E, H), dtype=jnp.float32) * 0.02
    wk = jax.random.normal(kk, (NUM_HEADS, E, H), dtype=jnp.float32) * 0.02
    wv = jax.random.normal(kv, (NUM_HEADS, E, H), dtype=jnp.float32) * 0.02
    wp = jax.random.normal(kp, (E, E), dtype=jnp.float32) * 0.02   # PyTorch Linear weight (out, in)
    bp = jax.random.normal(kb, (E,), dtype=jnp.float32) * 0.02

    # one-time parameter repacking (init-time in a real model)
    w_qkv, wp_t, bp2 = pack_params(wq, wk, wv, wp, bp)

    out = multiple_heads_forward(x, w_qkv, wp_t, bp2)
    out = jax.block_until_ready(out)

    ref = reference_forward(x, wq, wk, wv, wp, bp)
    assert out.shape == (B, T, E)
    # tolerance loosened slightly for the EUP approximate-reciprocal softmax norm
    assert jnp.allclose(out, ref, atol=2e-3, rtol=2e-3)

    print("KERNEL_OK")
</pallas_src>

<mosaic_0001>
module attributes {stable_mosaic.version = 11 : i64} {
  func.func @multiple_heads_kernel(%arg0: i32, %arg1: memref<16x32xf32, #tpu.memory_space<vmem>>, %arg2: memref<32x96xf32, #tpu.memory_space<vmem>>, %arg3: memref<32x32xf32, #tpu.memory_space<vmem>>, %arg4: memref<1x32xf32, #tpu.memory_space<vmem>>, %arg5: memref<16x32xf32, #tpu.memory_space<vmem>>, %arg6: memref<16x32xf32, #tpu.memory_space<vmem>>) attributes {dimension_semantics = [#tpu.dimension_semantics<parallel>], iteration_bounds = array<i64: 1>, scalar_prefetch = 0 : i64, scratch_operands = 1 : i64, tpu.core_type = #tpu.core_type<tc>, window_params = [{transform_indices = @transform_0, window_bounds = array<i64: 16, 32>}, {pipeline_mode = #tpu.pipeline_mode<synchronous>, transform_indices = @transform_1, window_bounds = array<i64: 32, 96>}, {pipeline_mode = #tpu.pipeline_mode<synchronous>, transform_indices = @transform_2, window_bounds = array<i64: 32, 32>}, {pipeline_mode = #tpu.pipeline_mode<synchronous>, transform_indices = @transform_3, window_bounds = array<i64: 1, 32>}, {transform_indices = @transform_4, window_bounds = array<i64: 16, 32>}]} {
    %c0 = arith.constant 0 : index
    %c0_0 = arith.constant 0 : index
    %0 = vector.load %arg1[%c0, %c0_0] : memref<16x32xf32, #tpu.memory_space<vmem>>, vector<16x32xf32>
    %c0_1 = arith.constant 0 : index
    %c0_2 = arith.constant 0 : index
    %1 = vector.load %arg2[%c0_1, %c0_2] : memref<32x96xf32, #tpu.memory_space<vmem>>, vector<32x96xf32>
    %cst = arith.constant dense<0.000000e+00> : vector<16x96xf32>
    %2 = tpu.matmul %0, %1, %cst {dimension_numbers = #tpu.dot_dimension_numbers<[1], [0], [0], [1], [0, 0, 1, 1], [], []>} : vector<16x32xf32>, vector<32x96xf32>, vector<16x96xf32> -> vector<16x96xf32>
    %3 = tpu.iota {dimensions = array<i32: 0>} : vector<8x8xi32>
    %4 = tpu.iota {dimensions = array<i32: 1>} : vector<8x8xi32>
    %5 = arith.cmpi sge, %3, %4 : vector<8x8xi32>
    %cst_3 = arith.constant 0.000000e+00 : f32
    %cst_4 = arith.constant -1.000000e+30 : f32
    %6 = vector.broadcast %cst_3 : f32 to vector<8x8xf32>
    %7 = vector.broadcast %cst_4 : f32 to vector<8x8xf32>
    %8 = arith.select %5, %6, %7 : vector<8x8xi1>, vector<8x8xf32>
    %9 = vector.extract_strided_slice %2 {offsets = [0, 0], sizes = [8, 96], strides = [1, 1]} : vector<16x96xf32> to vector<8x96xf32>
    %10 = vector.extract_strided_slice %9 {offsets = [0, 0], sizes = [8, 8], strides = [1, 1]} : vector<8x96xf32> to vector<8x8xf32>
    %11 = vector.extract_strided_slice %9 {offsets = [0, 32], sizes = [8, 8], strides = [1, 1]} : vector<8x96xf32> to vector<8x8xf32>
    %12 = vector.extract_strided_slice %9 {offsets = [0, 64], sizes = [8, 8], strides = [1, 1]} : vector<8x96xf32> to vector<8x8xf32>
    %cst_5 = arith.constant dense<0.000000e+00> : vector<8x8xf32>
    %13 = tpu.matmul %10, %11, %cst_5 {dimension_numbers = #tpu.dot_dimension_numbers<[1], [1], [0], [0], [0, 0, 1, 0], [], []>} : vector<8x8xf32>, vector<8x8xf32>, vector<8x8xf32> -> vector<8x8xf32>
    %cst_6 = arith.constant 0.353553385 : f32
    %14 = vector.broadcast %cst_6 : f32 to vector<8x8xf32>
    %15 = arith.mulf %13, %14 : vector<8x8xf32>
    %16 = arith.addf %15, %8 : vector<8x8xf32>
    %cst_7 = arith.constant dense<0xFF800000> : vector<8xf32>
    %17 = vector.multi_reduction <maximumf>, %16, %cst_7 [1] : vector<8x8xf32> to vector<8xf32>
    %18 = vector.shape_cast %17 : vector<8xf32> to vector<8x1xf32>
    %19 = vector.broadcast %18 : vector<8x1xf32> to vector<8x8xf32>
    %20 = arith.subf %16, %19 : vector<8x8xf32>
    %21 = math.exp %20 : vector<8x8xf32>
    %cst_8 = arith.constant dense<0.000000e+00> : vector<8xf32>
    %22 = vector.multi_reduction <add>, %21, %cst_8 [1] : vector<8x8xf32> to vector<8xf32>
    %23 = vector.shape_cast %22 : vector<8xf32> to vector<8x1xf32>
    %24 = tpu.reciprocal %23 {approx = true} : vector<8x1xf32> -> vector<8x1xf32>
    %25 = vector.broadcast %24 : vector<8x1xf32> to vector<8x8xf32>
    %26 = arith.mulf %21, %25 : vector<8x8xf32>
    %cst_9 = arith.constant dense<0.000000e+00> : vector<8x8xf32>
    %27 = tpu.matmul %26, %12, %cst_9 {dimension_numbers = #tpu.dot_dimension_numbers<[1], [0], [0], [1], [0, 0, 1, 1], [], []>} : vector<8x8xf32>, vector<8x8xf32>, vector<8x8xf32> -> vector<8x8xf32>
    %c0_10 = arith.constant 0 : index
    %c0_11 = arith.constant 0 : index
    %28 = vector.load %arg6[%c0_10, %c0_11] : memref<16x32xf32, #tpu.memory_space<vmem>>, vector<8x8xf32>
    tpu.vector_store %arg6[%c0_10, %c0_11], %27 {strides = array<i32>} : memref<16x32xf32, #tpu.memory_space<vmem>>, vector<8x8xf32>,
    %29 = vector.extract_strided_slice %9 {offsets = [0, 8], sizes = [8, 8], strides = [1, 1]} : vector<8x96xf32> to vector<8x8xf32>
    %30 = vector.extract_strided_slice %9 {offsets = [0, 40], sizes = [8, 8], strides = [1, 1]} : vector<8x96xf32> to vector<8x8xf32>
    %31 = vector.extract_strided_slice %9 {offsets = [0, 72], sizes = [8, 8], strides = [1, 1]} : vector<8x96xf32> to vector<8x8xf32>
    %cst_12 = arith.constant dense<0.000000e+00> : vector<8x8xf32>
    %32 = tpu.matmul %29, %30, %cst_12 {dimension_numbers = #tpu.dot_dimension_numbers<[1], [1], [0], [0], [0, 0, 1, 0], [], []>} : vector<8x8xf32>, vector<8x8xf32>, vector<8x8xf32> -> vector<8x8xf32>
    %cst_13 = arith.constant 0.353553385 : f32
    %33 = vector.broadcast %cst_13 : f32 to vector<8x8xf32>
    %34 = arith.mulf %32, %33 : vector<8x8xf32>
    %35 = arith.addf %34, %8 : vector<8x8xf32>
    %cst_14 = arith.constant dense<0xFF800000> : vector<8xf32>
    %36 = vector.multi_reduction <maximumf>, %35, %cst_14 [1] : vector<8x8xf32> to vector<8xf32>
    %37 = vector.shape_cast %36 : vector<8xf32> to vector<8x1xf32>
    %38 = vector.broadcast %37 : vector<8x1xf32> to vector<8x8xf32>
    %39 = arith.subf %35, %38 : vector<8x8xf32>
    %40 = math.exp %39 : vector<8x8xf32>
    %cst_15 = arith.constant dense<0.000000e+00> : vector<8xf32>
    %41 = vector.multi_reduction <add>, %40, %cst_15 [1] : vector<8x8xf32> to vector<8xf32>
    %42 = vector.shape_cast %41 : vector<8xf32> to vector<8x1xf32>
    %43 = tpu.reciprocal %42 {approx = true} : vector<8x1xf32> -> vector<8x1xf32>
    %44 = vector.broadcast %43 : vector<8x1xf32> to vector<8x8xf32>
    %45 = arith.mulf %40, %44 : vector<8x8xf32>
    %cst_16 = arith.constant dense<0.000000e+00> : vector<8x8xf32>
    %46 = tpu.matmul %45, %31, %cst_16 {dimension_numbers = #tpu.dot_dimension_numbers<[1], [0], [0], [1], [0, 0, 1, 1], [], []>} : vector<8x8xf32>, vector<8x8xf32>, vector<8x8xf32> -> vector<8x8xf32>
    %c0_17 = arith.constant 0 : index
    %c8 = arith.constant 8 : index
    %47 = vector.load %arg6[%c0_17, %c8] : memref<16x32xf32, #tpu.memory_space<vmem>>, vector<8x8xf32>
    tpu.vector_store %arg6[%c0_17, %c8], %46 {strides = array<i32>} : memref<16x32xf32, #tpu.memory_space<vmem>>, vector<8x8xf32>,
    %48 = vector.extract_strided_slice %9 {offsets = [0, 16], sizes = [8, 8], strides = [1, 1]} : vector<8x96xf32> to vector<8x8xf32>
    %49 = vector.extract_strided_slice %9 {offsets = [0, 48], sizes = [8, 8], strides = [1, 1]} : vector<8x96xf32> to vector<8x8xf32>
    %50 = vector.extract_strided_slice %9 {offsets = [0, 80], sizes = [8, 8], strides = [1, 1]} : vector<8x96xf32> to vector<8x8xf32>
    %cst_18 = arith.constant dense<0.000000e+00> : vector<8x8xf32>
    %51 = tpu.matmul %48, %49, %cst_18 {dimension_numbers = #tpu.dot_dimension_numbers<[1], [1], [0], [0], [0, 0, 1, 0], [], []>} : vector<8x8xf32>, vector<8x8xf32>, vector<8x8xf32> -> vector<8x8xf32>
    %cst_19 = arith.constant 0.353553385 : f32
    %52 = vector.broadcast %cst_19 : f32 to vector<8x8xf32>
    %53 = arith.mulf %51, %52 : vector<8x8xf32>
    %54 = arith.addf %53, %8 : vector<8x8xf32>
    %cst_20 = arith.constant dense<0xFF800000> : vector<8xf32>
    %55 = vector.multi_reduction <maximumf>, %54, %cst_20 [1] : vector<8x8xf32> to vector<8xf32>
    %56 = vector.shape_cast %55 : vector<8xf32> to vector<8x1xf32>
    %57 = vector.broadcast %56 : vector<8x1xf32> to vector<8x8xf32>
    %58 = arith.subf %54, %57 : vector<8x8xf32>
    %59 = math.exp %58 : vector<8x8xf32>
    %cst_21 = arith.constant dense<0.000000e+00> : vector<8xf32>
    %60 = vector.multi_reduction <add>, %59, %cst_21 [1] : vector<8x8xf32> to vector<8xf32>
    %61 = vector.shape_cast %60 : vector<8xf32> to vector<8x1xf32>
    %62 = tpu.reciprocal %61 {approx = true} : vector<8x1xf32> -> vector<8x1xf32>
    %63 = vector.broadcast %62 : vector<8x1xf32> to vector<8x8xf32>
    %64 = arith.mulf %59, %63 : vector<8x8xf32>
    %cst_22 = arith.constant dense<0.000000e+00> : vector<8x8xf32>
    %65 = tpu.matmul %64, %50, %cst_22 {dimension_numbers = #tpu.dot_dimension_numbers<[1], [0], [0], [1], [0, 0, 1, 1], [], []>} : vector<8x8xf32>, vector<8x8xf32>, vector<8x8xf32> -> vector<8x8xf32>
    %c0_23 = arith.constant 0 : index
    %c16 = arith.constant 16 : index
    %66 = vector.load %arg6[%c0_23, %c16] : memref<16x32xf32, #tpu.memory_space<vmem>>, vector<8x8xf32>
    tpu.vector_store %arg6[%c0_23, %c16], %65 {strides = array<i32>} : memref<16x32xf32, #tpu.memory_space<vmem>>, vector<8x8xf32>,
    %67 = vector.extract_strided_slice %9 {offsets = [0, 24], sizes = [8, 8], strides = [1, 1]} : vector<8x96xf32> to vector<8x8xf32>
    %68 = vector.extract_strided_slice %9 {offsets = [0, 56], sizes = [8, 8], strides = [1, 1]} : vector<8x96xf32> to vector<8x8xf32>
    %69 = vector.extract_strided_slice %9 {offsets = [0, 88], sizes = [8, 8], strides = [1, 1]} : vector<8x96xf32> to vector<8x8xf32>
    %cst_24 = arith.constant dense<0.000000e+00> : vector<8x8xf32>
    %70 = tpu.matmul %67, %68, %cst_24 {dimension_numbers = #tpu.dot_dimension_numbers<[1], [1], [0], [0], [0, 0, 1, 0], [], []>} : vector<8x8xf32>, vector<8x8xf32>, vector<8x8xf32> -> vector<8x8xf32>
    %cst_25 = arith.constant 0.353553385 : f32
    %71 = vector.broadcast %cst_25 : f32 to vector<8x8xf32>
    %72 = arith.mulf %70, %71 : vector<8x8xf32>
    %73 = arith.addf %72, %8 : vector<8x8xf32>
    %cst_26 = arith.constant dense<0xFF800000> : vector<8xf32>
    %74 = vector.multi_reduction <maximumf>, %73, %cst_26 [1] : vector<8x8xf32> to vector<8xf32>
    %75 = vector.shape_cast %74 : vector<8xf32> to vector<8x1xf32>
    %76 = vector.broadcast %75 : vector<8x1xf32> to vector<8x8xf32>
    %77 = arith.subf %73, %76 : vector<8x8xf32>
    %78 = math.exp %77 : vector<8x8xf32>
    %cst_27 = arith.constant dense<0.000000e+00> : vector<8xf32>
    %79 = vector.multi_reduction <add>, %78, %cst_27 [1] : vector<8x8xf32> to vector<8xf32>
    %80 = vector.shape_cast %79 : vector<8xf32> to vector<8x1xf32>
    %81 = tpu.reciprocal %80 {approx = true} : vector<8x1xf32> -> vector<8x1xf32>
    %82 = vector.broadcast %81 : vector<8x1xf32> to vector<8x8xf32>
    %83 = arith.mulf %78, %82 : vector<8x8xf32>
    %cst_28 = arith.constant dense<0.000000e+00> : vector<8x8xf32>
    %84 = tpu.matmul %83, %69, %cst_28 {dimension_numbers = #tpu.dot_dimension_numbers<[1], [0], [0], [1], [0, 0, 1, 1], [], []>} : vector<8x8xf32>, vector<8x8xf32>, vector<8x8xf32> -> vector<8x8xf32>
    %c0_29 = arith.constant 0 : index
    %c24 = arith.constant 24 : index
    %85 = vector.load %arg6[%c0_29, %c24] : memref<16x32xf32, #tpu.memory_space<vmem>>, vector<8x8xf32>
    tpu.vector_store %arg6[%c0_29, %c24], %84 {strides = array<i32>} : memref<16x32xf32, #tpu.memory_space<vmem>>, vector<8x8xf32>,
    %86 = vector.extract_strided_slice %2 {offsets = [8, 0], sizes = [8, 96], strides = [1, 1]} : vector<16x96xf32> to vector<8x96xf32>
    %87 = vector.extract_strided_slice %86 {offsets = [0, 0], sizes = [8, 8], strides = [1, 1]} : vector<8x96xf32> to vector<8x8xf32>
    %88 = vector.extract_strided_slice %86 {offsets = [0, 32], sizes = [8, 8], strides = [1, 1]} : vector<8x96xf32> to vector<8x8xf32>
    %89 = vector.extract_strided_slice %86 {offsets = [0, 64], sizes = [8, 8], strides = [1, 1]} : vector<8x96xf32> to vector<8x8xf32>
    %cst_30 = arith.constant dense<0.000000e+00> : vector<8x8xf32>
    %90 = tpu.matmul %87, %88, %cst_30 {dimension_numbers = #tpu.dot_dimension_numbers<[1], [1], [0], [0], [0, 0, 1, 0], [], []>} : vector<8x8xf32>, vector<8x8xf32>, vector<8x8xf32> -> vector<8x8xf32>
    %cst_31 = arith.constant 0.353553385 : f32
    %91 = vector.broadcast %cst_31 : f32 to vector<8x8xf32>
    %92 = arith.mulf %90, %91 : vector<8x8xf32>
    %93 = arith.addf %92, %8 : vector<8x8xf32>
    %cst_32 = arith.constant dense<0xFF800000> : vector<8xf32>
    %94 = vector.multi_reduction <maximumf>, %93, %cst_32 [1] : vector<8x8xf32> to vector<8xf32>
    %95 = vector.shape_cast %94 : vector<8xf32> to vector<8x1xf32>
    %96 = vector.broadcast %95 : vector<8x1xf32> to vector<8x8xf32>
    %97 = arith.subf %93, %96 : vector<8x8xf32>
    %98 = math.exp %97 : vector<8x8xf32>
    %cst_33 = arith.constant dense<0.000000e+00> : vector<8xf32>
    %99 = vector.multi_reduction <add>, %98, %cst_33 [1] : vector<8x8xf32> to vector<8xf32>
    %100 = vector.shape_cast %99 : vector<8xf32> to vector<8x1xf32>
    %101 = tpu.reciprocal %100 {approx = true} : vector<8x1xf32> -> vector<8x1xf32>
    %102 = vector.broadcast %101 : vector<8x1xf32> to vector<8x8xf32>
    %103 = arith.mulf %98, %102 : vector<8x8xf32>
    %cst_34 = arith.constant dense<0.000000e+00> : vector<8x8xf32>
    %104 = tpu.matmul %103, %89, %cst_34 {dimension_numbers = #tpu.dot_dimension_numbers<[1], [0], [0], [1], [0, 0, 1, 1], [], []>} : vector<8x8xf32>, vector<8x8xf32>, vector<8x8xf32> -> vector<8x8xf32>
    %c8_35 = arith.constant 8 : index
    %c0_36 = arith.constant 0 : index
    %105 = vector.load %arg6[%c8_35, %c0_36] : memref<16x32xf32, #tpu.memory_space<vmem>>, vector<8x8xf32>
    tpu.vector_store %arg6[%c8_35, %c0_36], %104 {strides = array<i32>} : memref<16x32xf32, #tpu.memory_space<vmem>>, vector<8x8xf32>,
    %106 = vector.extract_strided_slice %86 {offsets = [0, 8], sizes = [8, 8], strides = [1, 1]} : vector<8x96xf32> to vector<8x8xf32>
    %107 = vector.extract_strided_slice %86 {offsets = [0, 40], sizes = [8, 8], strides = [1, 1]} : vector<8x96xf32> to vector<8x8xf32>
    %108 = vector.extract_strided_slice %86 {offsets = [0, 72], sizes = [8, 8], strides = [1, 1]} : vector<8x96xf32> to vector<8x8xf32>
    %cst_37 = arith.constant dense<0.000000e+00> : vector<8x8xf32>
    %109 = tpu.matmul %106, %107, %cst_37 {dimension_numbers = #tpu.dot_dimension_numbers<[1], [1], [0], [0], [0, 0, 1, 0], [], []>} : vector<8x8xf32>, vector<8x8xf32>, vector<8x8xf32> -> vector<8x8xf32>
    %cst_38 = arith.constant 0.353553385 : f32
    %110 = vector.broadcast %cst_38 : f32 to vector<8x8xf32>
    %111 = arith.mulf %109, %110 : vector<8x8xf32>
    %112 = arith.addf %111, %8 : vector<8x8xf32>
    %cst_39 = arith.constant dense<0xFF800000> : vector<8xf32>
    %113 = vector.multi_reduction <maximumf>, %112, %cst_39 [1] : vector<8x8xf32> to vector<8xf32>
    %114 = vector.shape_cast %113 : vector<8xf32> to vector<8x1xf32>
    %115 = vector.broadcast %114 : vector<8x1xf32> to vector<8x8xf32>
    %116 = arith.subf %112, %115 : vector<8x8xf32>
    %117 = math.exp %116 : vector<8x8xf32>
    %cst_40 = arith.constant dense<0.000000e+00> : vector<8xf32>
    %118 = vector.multi_reduction <add>, %117, %cst_40 [1] : vector<8x8xf32> to vector<8xf32>
    %119 = vector.shape_cast %118 : vector<8xf32> to vector<8x1xf32>
    %120 = tpu.reciprocal %119 {approx = true} : vector<8x1xf32> -> vector<8x1xf32>
    %121 = vector.broadcast %120 : vector<8x1xf32> to vector<8x8xf32>
    %122 = arith.mulf %117, %121 : vector<8x8xf32>
    %cst_41 = arith.constant dense<0.000000e+00> : vector<8x8xf32>
    %123 = tpu.matmul %122, %108, %cst_41 {dimension_numbers = #tpu.dot_dimension_numbers<[1], [0], [0], [1], [0, 0, 1, 1], [], []>} : vector<8x8xf32>, vector<8x8xf32>, vector<8x8xf32> -> vector<8x8xf32>
    %c8_42 = arith.constant 8 : index
    %c8_43 = arith.constant 8 : index
    %124 = vector.load %arg6[%c8_42, %c8_43] : memref<16x32xf32, #tpu.memory_space<vmem>>, vector<8x8xf32>
    tpu.vector_store %arg6[%c8_42, %c8_43], %123 {strides = array<i32>} : memref<16x32xf32, #tpu.memory_space<vmem>>, vector<8x8xf32>,
    %125 = vector.extract_strided_slice %86 {offsets = [0, 16], sizes = [8, 8], strides = [1, 1]} : vector<8x96xf32> to vector<8x8xf32>
    %126 = vector.extract_strided_slice %86 {offsets = [0, 48], sizes = [8, 8], strides = [1, 1]} : vector<8x96xf32> to vector<8x8xf32>
    %127 = vector.extract_strided_slice %86 {offsets = [0, 80], sizes = [8, 8], strides = [1, 1]} : vector<8x96xf32> to vector<8x8xf32>
    %cst_44 = arith.constant dense<0.000000e+00> : vector<8x8xf32>
    %128 = tpu.matmul %125, %126, %cst_44 {dimension_numbers = #tpu.dot_dimension_numbers<[1], [1], [0], [0], [0, 0, 1, 0], [], []>} : vector<8x8xf32>, vector<8x8xf32>, vector<8x8xf32> -> vector<8x8xf32>
    %cst_45 = arith.constant 0.353553385 : f32
    %129 = vector.broadcast %cst_45 : f32 to vector<8x8xf32>
    %130 = arith.mulf %128, %129 : vector<8x8xf32>
    %131 = arith.addf %130, %8 : vector<8x8xf32>
    %cst_46 = arith.constant dense<0xFF800000> : vector<8xf32>
    %132 = vector.multi_reduction <maximumf>, %131, %cst_46 [1] : vector<8x8xf32> to vector<8xf32>
    %133 = vector.shape_cast %132 : vector<8xf32> to vector<8x1xf32>
    %134 = vector.broadcast %133 : vector<8x1xf32> to vector<8x8xf32>
    %135 = arith.subf %131, %134 : vector<8x8xf32>
    %136 = math.exp %135 : vector<8x8xf32>
    %cst_47 = arith.constant dense<0.000000e+00> : vector<8xf32>
    %137 = vector.multi_reduction <add>, %136, %cst_47 [1] : vector<8x8xf32> to vector<8xf32>
    %138 = vector.shape_cast %137 : vector<8xf32> to vector<8x1xf32>
    %139 = tpu.reciprocal %138 {approx = true} : vector<8x1xf32> -> vector<8x1xf32>
    %140 = vector.broadcast %139 : vector<8x1xf32> to vector<8x8xf32>
    %141 = arith.mulf %136, %140 : vector<8x8xf32>
    %cst_48 = arith.constant dense<0.000000e+00> : vector<8x8xf32>
    %142 = tpu.matmul %141, %127, %cst_48 {dimension_numbers = #tpu.dot_dimension_numbers<[1], [0], [0], [1], [0, 0, 1, 1], [], []>} : vector<8x8xf32>, vector<8x8xf32>, vector<8x8xf32> -> vector<8x8xf32>
    %c8_49 = arith.constant 8 : index
    %c16_50 = arith.constant 16 : index
    %143 = vector.load %arg6[%c8_49, %c16_50] : memref<16x32xf32, #tpu.memory_space<vmem>>, vector<8x8xf32>
    tpu.vector_store %arg6[%c8_49, %c16_50], %142 {strides = array<i32>} : memref<16x32xf32, #tpu.memory_space<vmem>>, vector<8x8xf32>,
    %144 = vector.extract_strided_slice %86 {offsets = [0, 24], sizes = [8, 8], strides = [1, 1]} : vector<8x96xf32> to vector<8x8xf32>
    %145 = vector.extract_strided_slice %86 {offsets = [0, 56], sizes = [8, 8], strides = [1, 1]} : vector<8x96xf32> to vector<8x8xf32>
    %146 = vector.extract_strided_slice %86 {offsets = [0, 88], sizes = [8, 8], strides = [1, 1]} : vector<8x96xf32> to vector<8x8xf32>
    %cst_51 = arith.constant dense<0.000000e+00> : vector<8x8xf32>
    %147 = tpu.matmul %144, %145, %cst_51 {dimension_numbers = #tpu.dot_dimension_numbers<[1], [1], [0], [0], [0, 0, 1, 0], [], []>} : vector<8x8xf32>, vector<8x8xf32>, vector<8x8xf32> -> vector<8x8xf32>
    %cst_52 = arith.constant 0.353553385 : f32
    %148 = vector.broadcast %cst_52 : f32 to vector<8x8xf32>
    %149 = arith.mulf %147, %148 : vector<8x8xf32>
    %150 = arith.addf %149, %8 : vector<8x8xf32>
    %cst_53 = arith.constant dense<0xFF800000> : vector<8xf32>
    %151 = vector.multi_reduction <maximumf>, %150, %cst_53 [1] : vector<8x8xf32> to vector<8xf32>
    %152 = vector.shape_cast %151 : vector<8xf32> to vector<8x1xf32>
    %153 = vector.broadcast %152 : vector<8x1xf32> to vector<8x8xf32>
    %154 = arith.subf %150, %153 : vector<8x8xf32>
    %155 = math.exp %154 : vector<8x8xf32>
    %cst_54 = arith.constant dense<0.000000e+00> : vector<8xf32>
    %156 = vector.multi_reduction <add>, %155, %cst_54 [1] : vector<8x8xf32> to vector<8xf32>
    %157 = vector.shape_cast %156 : vector<8xf32> to vector<8x1xf32>
    %158 = tpu.reciprocal %157 {approx = true} : vector<8x1xf32> -> vector<8x1xf32>
    %159 = vector.broadcast %158 : vector<8x1xf32> to vector<8x8xf32>
    %160 = arith.mulf %155, %159 : vector<8x8xf32>
    %cst_55 = arith.constant dense<0.000000e+00> : vector<8x8xf32>
    %161 = tpu.matmul %160, %146, %cst_55 {dimension_numbers = #tpu.dot_dimension_numbers<[1], [0], [0], [1], [0, 0, 1, 1], [], []>} : vector<8x8xf32>, vector<8x8xf32>, vector<8x8xf32> -> vector<8x8xf32>
    %c8_56 = arith.constant 8 : index
    %c24_57 = arith.constant 24 : index
    %162 = vector.load %arg6[%c8_56, %c24_57] : memref<16x32xf32, #tpu.memory_space<vmem>>, vector<8x8xf32>
    tpu.vector_store %arg6[%c8_56, %c24_57], %161 {strides = array<i32>} : memref<16x32xf32, #tpu.memory_space<vmem>>, vector<8x8xf32>,
    %c0_58 = arith.constant 0 : index
    %c0_59 = arith.constant 0 : index
    %163 = vector.load %arg6[%c0_58, %c0_59] : memref<16x32xf32, #tpu.memory_space<vmem>>, vector<16x32xf32>
    %c0_60 = arith.constant 0 : index
    %c0_61 = arith.constant 0 : index
    %164 = vector.load %arg3[%c0_60, %c0_61] : memref<32x32xf32, #tpu.memory_space<vmem>>, vector<32x32xf32>
    %cst_62 = arith.constant dense<0.000000e+00> : vector<16x32xf32>
    %165 = tpu.matmul %163, %164, %cst_62 {dimension_numbers = #tpu.dot_dimension_numbers<[1], [0], [0], [1], [0, 0, 1, 1], [], []>} : vector<16x32xf32>, vector<32x32xf32>, vector<16x32xf32> -> vector<16x32xf32>
    %c0_63 = arith.constant 0 : index
    %c0_64 = arith.constant 0 : index
    %166 = vector.load %arg4[%c0_63, %c0_64] : memref<1x32xf32, #tpu.memory_space<vmem>>, vector<1x32xf32>
    %167 = vector.shape_cast %166 : vector<1x32xf32> to vector<32xf32>
    %168 = vector.shape_cast %167 : vector<32xf32> to vector<1x32xf32>
    %169 = vector.broadcast %168 : vector<1x32xf32> to vector<16x32xf32>
    %170 = arith.addf %165, %169 : vector<16x32xf32>
    %c0_65 = arith.constant 0 : index
    %c0_66 = arith.constant 0 : index
    %171 = vector.load %arg5[%c0_65, %c0_66] : memref<16x32xf32, #tpu.memory_space<vmem>>, vector<16x32xf32>
    tpu.vector_store %arg5[%c0_65, %c0_66], %170 {strides = array<i32>} : memref<16x32xf32, #tpu.memory_space<vmem>>, vector<16x32xf32>,
    return
  }
  func.func @transform_0(%arg0: i32) -> (i32, i32) {
    %c0_i32 = arith.constant 0 : i32
    %c0_i32_0 = arith.constant 0 : i32
    return %arg0, %c0_i32 : i32, i32
  }
  func.func @transform_1(%arg0: i32) -> (i32, i32) {
    %c0_i32 = arith.constant 0 : i32
    %c0_i32_0 = arith.constant 0 : i32
    %c0_i32_1 = arith.constant 0 : i32
    return %c0_i32, %c0_i32_0 : i32, i32
  }
  func.func @transform_2(%arg0: i32) -> (i32, i32) {
    %c0_i32 = arith.constant 0 : i32
    %c0_i32_0 = arith.constant 0 : i32
    %c0_i32_1 = arith.constant 0 : i32
    return %c0_i32, %c0_i32_0 : i32, i32
  }
  func.func @transform_3(%arg0: i32) -> (i32, i32) {
    %c0_i32 = arith.constant 0 : i32
    %c0_i32_0 = arith.constant 0 : i32
    %c0_i32_1 = arith.constant 0 : i32
    return %c0_i32, %c0_i32_0 : i32, i32
  }
  func.func @transform_4(%arg0: i32) -> (i32, i32) {
    %c0_i32 = arith.constant 0 : i32
    %c0_i32_0 = arith.constant 0 : i32
    return %arg0, %c0_i32 : i32, i32
  }
}

</mosaic_0001>

<llo_original>
// kernel: tpu_custom_call.1
$region0: #{tpu_custom_call.1}
  #allocation0 [shape = 'u32[]', space=smem, size = 0x4, offset = 0x4, fixed_abs, tag = 'smem constant byte address 0x4 - core index']
  #allocation1 [shape = 'u32[144,128]{1,0:T(1,128)}', space=vmem, size = 0x12000, scoped, tag = 'internal scratch']
  #allocation2 [shape = 'f32[16,32]{1,0:T(8,128)}', space=vmem, size = 0x2000, scoped, tag = 'scratch operand']
  %s0 = inlined_call_operand.hbm [shape: f32[16,32], index: 0, kind: input, shape index: {}]
  %s1 = inlined_call_operand.hbm [shape: f32[32,96], index: 1, kind: input, shape index: {}]
  %s2 = inlined_call_operand.hbm [shape: f32[32,32], index: 2, kind: input, shape index: {}]
  %s3 = inlined_call_operand.vmem [shape: f32[1,32], index: 3, kind: input, shape index: {}]
  %s4 = inlined_call_operand.hbm [shape: f32[16,32], index: 4, kind: output, shape index: {}]
  %s5 = sld [smem:[#allocation0]]
  $region38: #{tpu_custom_call.1} parent=0
    _
  %s7 = ssub.s32 1, %s5
  %s8 = scalar_select 0, %s7, %s5
  $region1: #{tpu_custom_call.1} parent=0
    #allocation3 [shape = 'u8[8192]{0}', space=vmem, size = 0x2000, scoped, tag = 'input window, operand 0, single buffered']
    #allocation4 [shape = 's32[1]{0}', space=sflag, size = 0x4, scoped, tag = 'scoped memory for tpu_custom_call.1']
    #allocation5 [shape = 's32[1]{0}', space=sflag, size = 0x4, scoped, tag = 'scoped memory for tpu_custom_call.1']
    #allocation6 [shape = 'u8[16384]{0}', space=vmem, size = 0x4000, scoped, tag = 'input window, operand 1, single buffered']
    #allocation7 [shape = 's32[1]{0}', space=sflag, size = 0x4, scoped, tag = 'scoped memory for tpu_custom_call.1']
    #allocation8 [shape = 'u8[16384]{0}', space=vmem, size = 0x4000, scoped, tag = 'input window, operand 2, single buffered']
    #allocation9 [shape = 'u8[8192]{0}', space=vmem, size = 0x2000, scoped, tag = 'output window, operand 0, single buffered']
    %9 = vsyncpa [#allocation4], 0
    %10 = vsyncpa [#allocation7], 0
    %11 = vsyncpa [#allocation5], 0
    // Predicated region
    $region2: #{tpu_custom_call.1} parent=1 // pred_check
      _
    $region3: #{tpu_custom_call.1} parent=1 // pred_check_branch
      %13 = sbr.rel (0) target = $region5
    $region4: #{tpu_custom_call.1} parent=1 // pred_region
      %s15 = ssub.s32 256, 256
      %16 = vsyncadd [#allocation4], %s15
      %s17 = sshll.u32 [#allocation3], 4
      %s18 = int_to_ptr.vmem [resolvable:$true] %s17
      %23 = dma.hbm_to_vmem [thread:$0]  %s0, 256, %s18, [#allocation4], 128, 128, 8
    $region5: #{tpu_custom_call.1} parent=1 // pred_fallthru
      _
    // Predicated region
    $region6: #{tpu_custom_call.1} parent=1 // pred_check
      _
    $region7: #{tpu_custom_call.1} parent=1 // pred_check_branch
      %25 = sbr.rel (0) target = $region9
    $region8: #{tpu_custom_call.1} parent=1 // pred_region
      %s27 = ssub.s32 512, 512
      %28 = vsyncadd [#allocation7], %s27
      %s29 = sshll.u32 [#allocation6], 4
      %s30 = int_to_ptr.vmem [resolvable:$true] %s29
      %35 = dma.hbm_to_vmem [thread:$0]  %s1, 512, %s30, [#allocation7], 128, 128, 8
    $region9: #{tpu_custom_call.1} parent=1 // pred_fallthru
      _
    // Predicated region
    $region10: #{tpu_custom_call.1} parent=1 // pred_check
      _
    $region11: #{tpu_custom_call.1} parent=1 // pred_check_branch
      %37 = sbr.rel (0) target = $region13
    $region12: #{tpu_custom_call.1} parent=1 // pred_region
      %s39 = ssub.s32 512, 512
      %40 = vsyncadd [#allocation7], %s39
      %s41 = sshll.u32 [#allocation8], 4
      %s42 = int_to_ptr.vmem [resolvable:$true] %s41
      %47 = dma.hbm_to_vmem [thread:$0]  %s2, 512, %s42, [#allocation7], 128, 128, 8
    $region13: #{tpu_custom_call.1} parent=1 // pred_fallthru
      _
    // Predicated region
    $region14: #{tpu_custom_call.1} parent=1 // pred_check
      _
    $region15: #{tpu_custom_call.1} parent=1 // pred_check_branch
      %49 = sbr.rel (0) target = $region17
    $region16: #{tpu_custom_call.1} parent=1 // pred_region
      _
    $region17: #{tpu_custom_call.1} parent=1 // pred_fallthru
      _
    // Predicated region
    $region18: #{tpu_custom_call.1} parent=1 // pred_check
      _
    $region19: #{tpu_custom_call.1} parent=1 // pred_check_branch
      %51 = sbr.rel (0) target = $region21
    $region20: #{tpu_custom_call.1} parent=1 // pred_region
      %52 = dma.done [#allocation4], 256
    $region21: #{tpu_custom_call.1} parent=1 // pred_fallthru
      _
    // Predicated region
    $region22: #{tpu_custom_call.1} parent=1 // pred_check
      _
    $region23: #{tpu_custom_call.1} parent=1 // pred_check_branch
      %54 = sbr.rel (0) target = $region25
    $region24: #{tpu_custom_call.1} parent=1 // pred_region
      %55 = dma.done [#allocation7], 512
    $region25: #{tpu_custom_call.1} parent=1 // pred_fallthru
      _
    // Predicated region
    $region26: #{tpu_custom_call.1} parent=1 // pred_check
      _
    $region27: #{tpu_custom_call.1} parent=1 // pred_check_branch
      %57 = sbr.rel (0) target = $region29
    $region28: #{tpu_custom_call.1} parent=1 // pred_region
      %58 = dma.done [#allocation7], 512
    $region29: #{tpu_custom_call.1} parent=1 // pred_fallthru
      _
    %v59 = vld [vmem:[#allocation3] sm:$0xff]
    %v60 = vld [vmem:[#allocation3 + $0x8] sm:$0xff]
    %v61 = vld [vmem:[#allocation6] sm:$0xff]
    %v62 = vld [vmem:[#allocation6 + $0x8] sm:$0xff]
    %v63 = vld [vmem:[#allocation6 + $0x10] sm:$0xff]
    %v64 = vld [vmem:[#allocation6 + $0x18] sm:$0xff]
    %vm65 = vcmask 261120
    %v67 = vsel %vm65, %v59, 0
    %v70 = vsel %vm65, %v60, 0
    %72 = vmatprep.subr.mxu0 0.0
    %73 = vmatpush1.msra.mxu0 %v61
    %74 = vmatprep.subr.mxu0 0.0
    %75 = vmatpush1.msra.mxu0 %v62
    %76 = vmatprep.subr.mxu0 0.0
    %77 = vmatpush1.msra.mxu0 %v63
    %78 = vmatprep.subr.mxu0 0.0
    %79 = vmatpush1.msra.mxu0 %v64
    %80 = vmatprep.subr.mxu0 0.0
    %81 = vmatpush1.msra.mxu0 0.0
    %82 = vmatprep.subr.mxu0 0.0
    %83 = vmatpush1.msra.mxu0 0.0
    %84 = vmatprep.subr.mxu0 0.0
    %85 = vmatpush1.msra.mxu0 0.0
    %86 = vmatprep.subr.mxu0 0.0
    %87 = vmatpush1.msra.mxu0 0.0
    %88 = vmatprep.subr.mxu0 0.0
    %89 = vmatpush1.msra.mxu0 0.0
    %90 = vmatprep.subr.mxu0 0.0
    %91 = vmatpush1.msra.mxu0 0.0
    %92 = vmatprep.subr.mxu0 0.0
    %93 = vmatpush1.msra.mxu0 0.0
    %94 = vmatprep.subr.mxu0 0.0
    %95 = vmatpush1.msra.mxu0 0.0
    %96 = vmatprep.subr.mxu0 0.0
    %97 = vmatpush1.msra.mxu0 0.0
    %98 = vmatprep.subr.mxu0 0.0
    %99 = vmatpush1.msra.mxu0 0.0
    %100 = vmatprep.subr.mxu0 0.0
    %101 = vmatpush1.msra.mxu0 0.0
    %102 = vmatprep.subr.mxu0 0.0
    %103 = vmatpush1.msra.mxu0 0.0
    %104 = vmatprep.subr.mxu0 0.0
    %105 = vmatpush1.msra.mxu0 0.0
    %106 = vmatprep.subr.mxu0 0.0
    %107 = vmatpush1.msra.mxu0 0.0
    %108 = vmatprep.subr.mxu0 0.0
    %109 = vmatpush1.msra.mxu0 0.0
    %110 = vmatprep.subr.mxu0 0.0
    %111 = vmatpush1.msra.mxu0 0.0
    %112 = vmatprep.subr.mxu0 0.0
    %113 = vmatpush1.msra.mxu0 0.0
    %114 = vmatprep.subr.mxu0 0.0
    %115 = vmatpush1.msra.mxu0 0.0
    %116 = vmatprep.subr.mxu0 0.0
    %117 = vmatpush1.msra.mxu0 0.0
    %118 = vmatprep.subr.mxu0 0.0
    %119 = vmatpush1.msra.mxu0 0.0
    %120 = vmatprep.subr.mxu0 0.0
    %121 = vmatpush1.msra.mxu0 0.0
    %122 = vmatprep.subr.mxu0 0.0
    %123 = vmatpush1.msra.mxu0 0.0
    %124 = vmatprep.subr.mxu0 0.0
    %125 = vmatpush1.msra.mxu0 0.0
    %126 = vmatprep.subr.mxu0 0.0
    %127 = vmatpush1.msra.mxu0 0.0
    %128 = vmatprep.subr.mxu0 0.0
    %129 = vmatpush1.msra.mxu0 0.0
    %130 = vmatprep.subr.mxu0 0.0
    %131 = vmatpush1.msra.mxu0 0.0
    %132 = vmatprep.subr.mxu0 0.0
    %133 = vmatpush1.msra.mxu0 0.0
    %134 = vmatprep.subr.mxu0 0.0
    %135 = vmatpush1.msra.mxu0 0.0
    %136 = vmatprep.mubr.f32.mxu0 0.0
    %137 = vmatmul.mubr.f32.gmra.mrb[0].mxu0 %v67
    %v138 = vpop.f32.mrb[0].mxu0
    %v139 = vadd.f32 0.0, %v138
    %v140 = vpop.f32.mrb[0].mxu0
    %141 = vmatprep.mubr.f32.mxu0 0.0
    %142 = vmatmul.mubr.f32.gmra.mrb[0].mxu0 %v70
    %v143 = vpop.f32.mrb[0].mxu0
    %v144 = vadd.f32 0.0, %v143
    %v145 = vpop.f32.mrb[0].mxu0
    %146 = vdwg.mxu0
    %v147 = vlaneseq
    %v148 = vshrl.u32 %v147, 7
    %v149 = vlaneseq
    %v150 = vand.u32 %v149, 127
    %vm151 = vcmp.ge.s32.totalorder %v148, %v150
    %v152 = vsel %vm151, 0.0, -1e+30
    %154 = vrot.lane.b32.xlu0 %v139, 96
    %v155 = vpop.permute.xlu0 %154
    %vm156 = vcmask 64512
    %v157 = vsel %vm156, %v139, 0
    %v159 = vsel %vm156, %v155, 0
    %161 = vmatprep.subr.mxu0 0.0
    %162 = vmatpush1.xpose.msra.mxu0 %v159
    %163 = vmatprep.subr.mxu0 0.0
    %164 = vmatpush1.xpose.msra.mxu0 0.0
    %165 = vmatprep.subr.mxu0 0.0
    %166 = vmatpush1.xpose.msra.mxu0 0.0
    %167 = vmatprep.subr.mxu0 0.0
    %168 = vmatpush1.xpose.msra.mxu0 0.0
    %169 = vmatprep.subr.mxu0 0.0
    %170 = vmatpush1.xpose.msra.mxu0 0.0
    %171 = vmatprep.subr.mxu0 0.0
    %172 = vmatpush1.xpose.msra.mxu0 0.0
    %173 = vmatprep.subr.mxu0 0.0
    %174 = vmatpush1.xpose.msra.mxu0 0.0
    %175 = vmatprep.subr.mxu0 0.0
    %176 = vmatpush1.xpose.msra.mxu0 0.0
    %177 = vmatprep.subr.mxu0 0.0
    %178 = vmatpush1.xpose.msra.mxu0 0.0
    %179 = vmatprep.subr.mxu0 0.0
    %180 = vmatpush1.xpose.msra.mxu0 0.0
    %181 = vmatprep.subr.mxu0 0.0
    %182 = vmatpush1.xpose.msra.mxu0 0.0
    %183 = vmatprep.subr.mxu0 0.0
    %184 = vmatpush1.xpose.msra.mxu0 0.0
    %185 = vmatprep.subr.mxu0 0.0
    %186 = vmatpush1.xpose.msra.mxu0 0.0
    %187 = vmatprep.subr.mxu0 0.0
    %188 = vmatpush1.xpose.msra.mxu0 0.0
    %189 = vmatprep.subr.mxu0 0.0
    %190 = vmatpush1.xpose.msra.mxu0 0.0
    %191 = vmatprep.subr.mxu0 0.0
    %192 = vmatpush1.xpose.msra.mxu0 0.0
    %193 = vmatprep.subr.mxu0 0.0
    %194 = vmatpush1.xpose.msra.mxu0 0.0
    %195 = vmatprep.subr.mxu0 0.0
    %196 = vmatpush1.xpose.msra.mxu0 0.0
    %197 = vmatprep.subr.mxu0 0.0
    %198 = vmatpush1.xpose.msra.mxu0 0.0
    %199 = vmatprep.subr.mxu0 0.0
    %200 = vmatpush1.xpose.msra.mxu0 0.0
    %201 = vmatprep.subr.mxu0 0.0
    %202 = vmatpush1.xpose.msra.mxu0 0.0
    %203 = vmatprep.subr.mxu0 0.0
    %204 = vmatpush1.xpose.msra.mxu0 0.0
    %205 = vmatprep.subr.mxu0 0.0
    %206 = vmatpush1.xpose.msra.mxu0 0.0
    %207 = vmatprep.subr.mxu0 0.0
    %208 = vmatpush1.xpose.msra.mxu0 0.0
    %209 = vmatprep.subr.mxu0 0.0
    %210 = vmatpush1.xpose.msra.mxu0 0.0
    %211 = vmatprep.subr.mxu0 0.0
    %212 = vmatpush1.xpose.msra.mxu0 0.0
    %213 = vmatprep.subr.mxu0 0.0
    %214 = vmatpush1.xpose.msra.mxu0 0.0
    %215 = vmatprep.subr.mxu0 0.0
    %216 = vmatpush1.xpose.msra.mxu0 0.0
    %217 = vmatprep.subr.mxu0 0.0
    %218 = vmatpush1.xpose.msra.mxu0 0.0
    %219 = vmatprep.subr.mxu0 0.0
    %220 = vmatpush1.xpose.msra.mxu0 0.0
    %221 = vmatprep.subr.mxu0 0.0
    %222 = vmatpush1.xpose.msra.mxu0 0.0
    %223 = vmatprep.subr.mxu0 0.0
    %224 = vmatpush1.xpose.msra.mxu0 0.0
    %225 = vmatprep.mubr.f32.mxu0 0.0
    %226 = vmatmul.mubr.f32.gmra.mrb[0].mxu0 %v157
    %v227 = vpop.f32.mrb[0].mxu0
    %v228 = vadd.f32 0.0, %v227
    %v229 = vpop.f32.mrb[0].mxu0
    %230 = vdwg.mxu0
    %v231 = vmul.f32 %v228, 0.35355338
    %v232 = vadd.f32 %v231, %v152
    %v233 = vsel %vm156, %v232, -inf
    %234 = vmax.xlane.f32.xlu0 %v233
    %v235 = vpop.xlane.xlu0 %234
    %v236 = vsub.f32 %v232, %v235
    %v237 = vmul.f32 %v236, 1.442695
    %v238 = vpow.pop %v237
    %v239 = vsel %vm156, %v238, 0.0
    %240 = vadd.xlane.f32.xlu0 %v239
    %v241 = vpop.xlane.xlu0 %240
    %v242 = vrcp.pop %v241
    %v243 = vmul.f32 %v238, %v242
    %244 = vrot.lane.b32.xlu0 %v139, 64
    %v245 = vpop.permute.xlu0 %244
    %v248 = vsel %vm156, %v243, 0
    %250 = vmatprep.subr.mxu0 0.0
    %251 = vmatpush1.msra.mxu0 %v245
    %252 = vmatprep.subr.mxu0 0.0
    %253 = vmatpush1.msra.mxu0 0.0
    %254 = vmatprep.subr.mxu0 0.0
    %255 = vmatpush1.msra.mxu0 0.0
    %256 = vmatprep.subr.mxu0 0.0
    %257 = vmatpush1.msra.mxu0 0.0
    %258 = vmatprep.subr.mxu0 0.0
    %259 = vmatpush1.msra.mxu0 0.0
    %260 = vmatprep.subr.mxu0 0.0
    %261 = vmatpush1.msra.mxu0 0.0
    %262 = vmatprep.subr.mxu0 0.0
    %263 = vmatpush1.msra.mxu0 0.0
    %264 = vmatprep.subr.mxu0 0.0
    %265 = vmatpush1.msra.mxu0 0.0
    %266 = vmatprep.subr.mxu0 0.0
    %267 = vmatpush1.msra.mxu0 0.0
    %268 = vmatprep.subr.mxu0 0.0
    %269 = vmatpush1.msra.mxu0 0.0
    %270 = vmatprep.subr.mxu0 0.0
    %271 = vmatpush1.msra.mxu0 0.0
    %272 = vmatprep.subr.mxu0 0.0
    %273 = vmatpush1.msra.mxu0 0.0
    %274 = vmatprep.subr.mxu0 0.0
    %275 = vmatpush1.msra.mxu0 0.0
    %276 = vmatprep.subr.mxu0 0.0
    %277 = vmatpush1.msra.mxu0 0.0
    %278 = vmatprep.subr.mxu0 0.0
    %279 = vmatpush1.msra.mxu0 0.0
    %280 = vmatprep.subr.mxu0 0.0
    %281 = vmatpush1.msra.mxu0 0.0
    %282 = vmatprep.subr.mxu0 0.0
    %283 = vmatpush1.msra.mxu0 0.0
    %284 = vmatprep.subr.mxu0 0.0
    %285 = vmatpush1.msra.mxu0 0.0
    %286 = vmatprep.subr.mxu0 0.0
    %287 = vmatpush1.msra.mxu0 0.0
    %288 = vmatprep.subr.mxu0 0.0
    %289 = vmatpush1.msra.mxu0 0.0
    %290 = vmatprep.subr.mxu0 0.0
    %291 = vmatpush1.msra.mxu0 0.0
    %292 = vmatprep.subr.mxu0 0.0
    %293 = vmatpush1.msra.mxu0 0.0
    %294 = vmatprep.subr.mxu0 0.0
    %295 = vmatpush1.msra.mxu0 0.0
    %296 = vmatprep.subr.mxu0 0.0
    %297 = vmatpush1.msra.mxu0 0.0
    %298 = vmatprep.subr.mxu0 0.0
    %299 = vmatpush1.msra.mxu0 0.0
    %300 = vmatprep.subr.mxu0 0.0
    %301 = vmatpush1.msra.mxu0 0.0
    %302 = vmatprep.subr.mxu0 0.0
    %303 = vmatpush1.msra.mxu0 0.0
    %304 = vmatprep.subr.mxu0 0.0
    %305 = vmatpush1.msra.mxu0 0.0
    %306 = vmatprep.subr.mxu0 0.0
    %307 = vmatpush1.msra.mxu0 0.0
    %308 = vmatprep.subr.mxu0 0.0
    %309 = vmatpush1.msra.mxu0 0.0
    %310 = vmatprep.subr.mxu0 0.0
    %311 = vmatpush1.msra.mxu0 0.0
    %312 = vmatprep.subr.mxu0 0.0
    %313 = vmatpush1.msra.mxu0 0.0
    %314 = vmatprep.mubr.f32.mxu0 0.0
    %315 = vmatmul.mubr.f32.gmra.mrb[0].mxu0 %v248
    %v316 = vpop.f32.mrb[0].mxu0
    %v317 = vadd.f32 0.0, %v316
    %v318 = vpop.f32.mrb[0].mxu0
    %319 = vdwg.mxu0
    %320 = vst.msk [vmem:[#allocation2] sm:$0xff] %vm156, %v317
    %321 = vrot.lane.b32.xlu0 %v139, 120
    %v322 = vpop.permute.xlu0 %321
    %323 = vrot.lane.b32.xlu0 %v139, 88
    %v324 = vpop.permute.xlu0 %323
    %v325 = vsel %vm156, %v322, 0
    %v327 = vsel %vm156, %v324, 0
    %329 = vmatprep.subr.mxu0 0.0
    %330 = vmatpush1.xpose.msra.mxu0 %v327
    %331 = vmatprep.subr.mxu0 0.0
    %332 = vmatpush1.xpose.msra.mxu0 0.0
    %333 = vmatprep.subr.mxu0 0.0
    %334 = vmatpush1.xpose.msra.mxu0 0.0
    %335 = vmatprep.subr.mxu0 0.0
    %336 = vmatpush1.xpose.msra.mxu0 0.0
    %337 = vmatprep.subr.mxu0 0.0
    %338 = vmatpush1.xpose.msra.mxu0 0.0
    %339 = vmatprep.subr.mxu0 0.0
    %340 = vmatpush1.xpose.msra.mxu0 0.0
    %341 = vmatprep.subr.mxu0 0.0
    %342 = vmatpush1.xpose.msra.mxu0 0.0
    %343 = vmatprep.subr.mxu0 0.0
    %344 = vmatpush1.xpose.msra.mxu0 0.0
    %345 = vmatprep.subr.mxu0 0.0
    %346 = vmatpush1.xpose.msra.mxu0 0.0
    %347 = vmatprep.subr.mxu0 0.0
    %348 = vmatpush1.xpose.msra.mxu0 0.0
    %349 = vmatprep.subr.mxu0 0.0
    %350 = vmatpush1.xpose.msra.mxu0 0.0
    %351 = vmatprep.subr.mxu0 0.0
    %352 = vmatpush1.xpose.msra.mxu0 0.0
    %353 = vmatprep.subr.mxu0 0.0
    %354 = vmatpush1.xpose.msra.mxu0 0.0
    %355 = vmatprep.subr.mxu0 0.0
    %356 = vmatpush1.xpose.msra.mxu0 0.0
    %357 = vmatprep.subr.mxu0 0.0
    %358 = vmatpush1.xpose.msra.mxu0 0.0
    %359 = vmatprep.subr.mxu0 0.0
    %360 = vmatpush1.xpose.msra.mxu0 0.0
    %361 = vmatprep.subr.mxu0 0.0
    %362 = vmatpush1.xpose.msra.mxu0 0.0
    %363 = vmatprep.subr.mxu0 0.0
    %364 = vmatpush1.xpose.msra.mxu0 0.0
    %365 = vmatprep.subr.mxu0 0.0
    %366 = vmatpush1.xpose.msra.mxu0 0.0
    %367 = vmatprep.subr.mxu0 0.0
    %368 = vmatpush1.xpose.msra.mxu0 0.0
    %369 = vmatprep.subr.mxu0 0.0
    %370 = vmatpush1.xpose.msra.mxu0 0.0
    %371 = vmatprep.subr.mxu0 0.0
    %372 = vmatpush1.xpose.msra.mxu0 0.0
    %373 = vmatprep.subr.mxu0 0.0
    %374 = vmatpush1.xpose.msra.mxu0 0.0
    %375 = vmatprep.subr.mxu0 0.0
    %376 = vmatpush1.xpose.msra.mxu0 0.0
    %377 = vmatprep.subr.mxu0 0.0
    %378 = vmatpush1.xpose.msra.mxu0 0.0
    %379 = vmatprep.subr.mxu0 0.0
    %380 = vmatpush1.xpose.msra.mxu0 0.0
    %381 = vmatprep.subr.mxu0 0.0
    %382 = vmatpush1.xpose.msra.mxu0 0.0
    %383 = vmatprep.subr.mxu0 0.0
    %384 = vmatpush1.xpose.msra.mxu0 0.0
    %385 = vmatprep.subr.mxu0 0.0
    %386 = vmatpush1.xpose.msra.mxu0 0.0
    %387 = vmatprep.subr.mxu0 0.0
    %388 = vmatpush1.xpose.msra.mxu0 0.0
    %389 = vmatprep.subr.mxu0 0.0
    %390 = vmatpush1.xpose.msra.mxu0 0.0
    %391 = vmatprep.subr.mxu0 0.0
    %392 = vmatpush1.xpose.msra.mxu0 0.0
    %393 = vmatprep.mubr.f32.mxu0 0.0
    %394 = vmatmul.mubr.f32.gmra.mrb[0].mxu0 %v325
    %v395 = vpop.f32.mrb[0].mxu0
    %v396 = vadd.f32 0.0, %v395
    %v397 = vpop.f32.mrb[0].mxu0
    %398 = vdwg.mxu0
    %v399 = vmul.f32 %v396, 0.35355338
    %v400 = vadd.f32 %v399, %v152
    %v401 = vsel %vm156, %v400, -inf
    %402 = vmax.xlane.f32.xlu0 %v401
    %v403 = vpop.xlane.xlu0 %402
    %v404 = vsub.f32 %v400, %v403
    %v405 = vmul.f32 %v404, 1.442695
    %v406 = vpow.pop %v405
    %v407 = vsel %vm156, %v406, 0.0
    %408 = vadd.xlane.f32.xlu0 %v407
    %v409 = vpop.xlane.xlu0 %408
    %v410 = vrcp.pop %v409
    %v411 = vmul.f32 %v406, %v410
    %412 = vrot.lane.b32.xlu0 %v139, 56
    %v413 = vpop.permute.xlu0 %412
    %v416 = vsel %vm156, %v411, 0
    %418 = vmatprep.subr.mxu0 0.0
    %419 = vmatpush1.msra.mxu0 %v413
    %420 = vmatprep.subr.mxu0 0.0
    %421 = vmatpush1.msra.mxu0 0.0
    %422 = vmatprep.subr.mxu0 0.0
    %423 = vmatpush1.msra.mxu0 0.0
    %424 = vmatprep.subr.mxu0 0.0
    %425 = vmatpush1.msra.mxu0 0.0
    %426 = vmatprep.subr.mxu0 0.0
    %427 = vmatpush1.msra.mxu0 0.0
    %428 = vmatprep.subr.mxu0 0.0
    %429 = vmatpush1.msra.mxu0 0.0
    %430 = vmatprep.subr.mxu0 0.0
    %431 = vmatpush1.msra.mxu0 0.0
    %432 = vmatprep.subr.mxu0 0.0
    %433 = vmatpush1.msra.mxu0 0.0
    %434 = vmatprep.subr.mxu0 0.0
    %435 = vmatpush1.msra.mxu0 0.0
    %436 = vmatprep.subr.mxu0 0.0
    %437 = vmatpush1.msra.mxu0 0.0
    %438 = vmatprep.subr.mxu0 0.0
    %439 = vmatpush1.msra.mxu0 0.0
    %440 = vmatprep.subr.mxu0 0.0
    %441 = vmatpush1.msra.mxu0 0.0
    %442 = vmatprep.subr.mxu0 0.0
    %443 = vmatpush1.msra.mxu0 0.0
    %444 = vmatprep.subr.mxu0 0.0
    %445 = vmatpush1.msra.mxu0 0.0
    %446 = vmatprep.subr.mxu0 0.0
    %447 = vmatpush1.msra.mxu0 0.0
    %448 = vmatprep.subr.mxu0 0.0
    %449 = vmatpush1.msra.mxu0 0.0
    %450 = vmatprep.subr.mxu0 0.0
    %451 = vmatpush1.msra.mxu0 0.0
    %452 = vmatprep.subr.mxu0 0.0
    %453 = vmatpush1.msra.mxu0 0.0
    %454 = vmatprep.subr.mxu0 0.0
    %455 = vmatpush1.msra.mxu0 0.0
    %456 = vmatprep.subr.mxu0 0.0
    %457 = vmatpush1.msra.mxu0 0.0
    %458 = vmatprep.subr.mxu0 0.0
    %459 = vmatpush1.msra.mxu0 0.0
    %460 = vmatprep.subr.mxu0 0.0
    %461 = vmatpush1.msra.mxu0 0.0
    %462 = vmatprep.subr.mxu0 0.0
    %463 = vmatpush1.msra.mxu0 0.0
    %464 = vmatprep.subr.mxu0 0.0
    %465 = vmatpush1.msra.mxu0 0.0
    %466 = vmatprep.subr.mxu0 0.0
    %467 = vmatpush1.msra.mxu0 0.0
    %468 = vmatprep.subr.mxu0 0.0
    %469 = vmatpush1.msra.mxu0 0.0
    %470 = vmatprep.subr.mxu0 0.0
    %471 = vmatpush1.msra.mxu0 0.0
    %472 = vmatprep.subr.mxu0 0.0
    %473 = vmatpush1.msra.mxu0 0.0
    %474 = vmatprep.subr.mxu0 0.0
    %475 = vmatpush1.msra.mxu0 0.0
    %476 = vmatprep.subr.mxu0 0.0
    %477 = vmatpush1.msra.mxu0 0.0
    %478 = vmatprep.subr.mxu0 0.0
    %479 = vmatpush1.msra.mxu0 0.0
    %480 = vmatprep.subr.mxu0 0.0
    %481 = vmatpush1.msra.mxu0 0.0
    %482 = vmatprep.mubr.f32.mxu0 0.0
    %483 = vmatmul.mubr.f32.gmra.mrb[0].mxu0 %v416
    %v484 = vpop.f32.mrb[0].mxu0
    %v485 = vadd.f32 0.0, %v484
    %v486 = vpop.f32.mrb[0].mxu0
    %487 = vdwg.mxu0
    %489 = vrot.lane.b32.xlu0 %v485, 8
    %v490 = vpop.permute.xlu0 %489
    %vm492 = vcmask 130112
    %493 = vst.msk [vmem:[#allocation2] sm:$0xff] %vm492, %v490
    %494 = vrot.lane.b32.xlu0 %v139, 112
    %v495 = vpop.permute.xlu0 %494
    %496 = vrot.lane.b32.xlu0 %v139, 80
    %v497 = vpop.permute.xlu0 %496
    %v498 = vsel %vm156, %v495, 0
    %v500 = vsel %vm156, %v497, 0
    %502 = vmatprep.subr.mxu0 0.0
    %503 = vmatpush1.xpose.msra.mxu0 %v500
    %504 = vmatprep.subr.mxu0 0.0
    %505 = vmatpush1.xpose.msra.mxu0 0.0
    %506 = vmatprep.subr.mxu0 0.0
    %507 = vmatpush1.xpose.msra.mxu0 0.0
    %508 = vmatprep.subr.mxu0 0.0
    %509 = vmatpush1.xpose.msra.mxu0 0.0
    %510 = vmatprep.subr.mxu0 0.0
    %511 = vmatpush1.xpose.msra.mxu0 0.0
    %512 = vmatprep.subr.mxu0 0.0
    %513 = vmatpush1.xpose.msra.mxu0 0.0
    %514 = vmatprep.subr.mxu0 0.0
    %515 = vmatpush1.xpose.msra.mxu0 0.0
    %516 = vmatprep.subr.mxu0 0.0
    %517 = vmatpush1.xpose.msra.mxu0 0.0
    %518 = vmatprep.subr.mxu0 0.0
    %519 = vmatpush1.xpose.msra.mxu0 0.0
    %520 = vmatprep.subr.mxu0 0.0
    %521 = vmatpush1.xpose.msra.mxu0 0.0
    %522 = vmatprep.subr.mxu0 0.0
    %523 = vmatpush1.xpose.msra.mxu0 0.0
    %524 = vmatprep.subr.mxu0 0.0
    %525 = vmatpush1.xpose.msra.mxu0 0.0
    %526 = vmatprep.subr.mxu0 0.0
    %527 = vmatpush1.xpose.msra.mxu0 0.0
    %528 = vmatprep.subr.mxu0 0.0
    %529 = vmatpush1.xpose.msra.mxu0 0.0
    %530 = vmatprep.subr.mxu0 0.0
    %531 = vmatpush1.xpose.msra.mxu0 0.0
    %532 = vmatprep.subr.mxu0 0.0
    %533 = vmatpush1.xpose.msra.mxu0 0.0
    %534 = vmatprep.subr.mxu0 0.0
    %535 = vmatpush1.xpose.msra.mxu0 0.0
    %536 = vmatprep.subr.mxu0 0.0
    %537 = vmatpush1.xpose.msra.mxu0 0.0
    %538 = vmatprep.subr.mxu0 0.0
    %539 = vmatpush1.xpose.msra.mxu0 0.0
    %540 = vmatprep.subr.mxu0 0.0
    %541 = vmatpush1.xpose.msra.mxu0 0.0
    %542 = vmatprep.subr.mxu0 0.0
    %543 = vmatpush1.xpose.msra.mxu0 0.0
    %544 = vmatprep.subr.mxu0 0.0
    %545 = vmatpush1.xpose.msra.mxu0 0.0
    %546 = vmatprep.subr.mxu0 0.0
    %547 = vmatpush1.xpose.msra.mxu0 0.0
    %548 = vmatprep.subr.mxu0 0.0
    %549 = vmatpush1.xpose.msra.mxu0 0.0
    %550 = vmatprep.subr.mxu0 0.0
    %551 = vmatpush1.xpose.msra.mxu0 0.0
    %552 = vmatprep.subr.mxu0 0.0
    %553 = vmatpush1.xpose.msra.mxu0 0.0
    %554 = vmatprep.subr.mxu0 0.0
    %555 = vmatpush1.xpose.msra.mxu0 0.0
    %556 = vmatprep.subr.mxu0 0.0
    %557 = vmatpush1.xpose.msra.mxu0 0.0
    %558 = vmatprep.subr.mxu0 0.0
    %559 = vmatpush1.xpose.msra.mxu0 0.0
    %560 = vmatprep.subr.mxu0 0.0
    %561 = vmatpush1.xpose.msra.mxu0 0.0
    %562 = vmatprep.subr.mxu0 0.0
    %563 = vmatpush1.xpose.msra.mxu0 0.0
    %564 = vmatprep.subr.mxu0 0.0
    %565 = vmatpush1.xpose.msra.mxu0 0.0
    %566 = vmatprep.mubr.f32.mxu0 0.0
    %567 = vmatmul.mubr.f32.gmra.mrb[0].mxu0 %v498
    %v568 = vpop.f32.mrb[0].mxu0
    %v569 = vadd.f32 0.0, %v568
    %v570 = vpop.f32.mrb[0].mxu0
    %571 = vdwg.mxu0
    %v572 = vmul.f32 %v569, 0.35355338
    %v573 = vadd.f32 %v572, %v152
    %v574 = vsel %vm156, %v573, -inf
    %575 = vmax.xlane.f32.xlu0 %v574
    %v576 = vpop.xlane.xlu0 %575
    %v577 = vsub.f32 %v573, %v576
    %v578 = vmul.f32 %v577, 1.442695
    %v579 = vpow.pop %v578
    %v580 = vsel %vm156, %v579, 0.0
    %581 = vadd.xlane.f32.xlu0 %v580
    %v582 = vpop.xlane.xlu0 %581
    %v583 = vrcp.pop %v582
    %v584 = vmul.f32 %v579, %v583
    %585 = vrot.lane.b32.xlu0 %v139, 48
    %v586 = vpop.permute.xlu0 %585
    %v589 = vsel %vm156, %v584, 0
    %591 = vmatprep.subr.mxu0 0.0
    %592 = vmatpush1.msra.mxu0 %v586
    %593 = vmatprep.subr.mxu0 0.0
    %594 = vmatpush1.msra.mxu0 0.0
    %595 = vmatprep.subr.mxu0 0.0
    %596 = vmatpush1.msra.mxu0 0.0
    %597 = vmatprep.subr.mxu0 0.0
    %598 = vmatpush1.msra.mxu0 0.0
    %599 = vmatprep.subr.mxu0 0.0
    %600 = vmatpush1.msra.mxu0 0.0
    %601 = vmatprep.subr.mxu0 0.0
    %602 = vmatpush1.msra.mxu0 0.0
    %603 = vmatprep.subr.mxu0 0.0
    %604 = vmatpush1.msra.mxu0 0.0
    %605 = vmatprep.subr.mxu0 0.0
    %606 = vmatpush1.msra.mxu0 0.0
    %607 = vmatprep.subr.mxu0 0.0
    %608 = vmatpush1.msra.mxu0 0.0
    %609 = vmatprep.subr.mxu0 0.0
    %610 = vmatpush1.msra.mxu0 0.0
    %611 = vmatprep.subr.mxu0 0.0
    %612 = vmatpush1.msra.mxu0 0.0
    %613 = vmatprep.subr.mxu0 0.0
    %614 = vmatpush1.msra.mxu0 0.0
    %615 = vmatprep.subr.mxu0 0.0
    %616 = vmatpush1.msra.mxu0 0.0
    %617 = vmatprep.subr.mxu0 0.0
    %618 = vmatpush1.msra.mxu0 0.0
    %619 = vmatprep.subr.mxu0 0.0
    %620 = vmatpush1.msra.mxu0 0.0
    %621 = vmatprep.subr.mxu0 0.0
    %622 = vmatpush1.msra.mxu0 0.0
    %623 = vmatprep.subr.mxu0 0.0
    %624 = vmatpush1.msra.mxu0 0.0
    %625 = vmatprep.subr.mxu0 0.0
    %626 = vmatpush1.msra.mxu0 0.0
    %627 = vmatprep.subr.mxu0 0.0
    %628 = vmatpush1.msra.mxu0 0.0
    %629 = vmatprep.subr.mxu0 0.0
    %630 = vmatpush1.msra.mxu0 0.0
    %631 = vmatprep.subr.mxu0 0.0
    %632 = vmatpush1.msra.mxu0 0.0
    %633 = vmatprep.subr.mxu0 0.0
    %634 = vmatpush1.msra.mxu0 0.0
    %635 = vmatprep.subr.mxu0 0.0
    %636 = vmatpush1.msra.mxu0 0.0
    %637 = vmatprep.subr.mxu0 0.0
    %638 = vmatpush1.msra.mxu0 0.0
    %639 = vmatprep.subr.mxu0 0.0
    %640 = vmatpush1.msra.mxu0 0.0
    %641 = vmatprep.subr.mxu0 0.0
    %642 = vmatpush1.msra.mxu0 0.0
    %643 = vmatprep.subr.mxu0 0.0
    %644 = vmatpush1.msra.mxu0 0.0
    %645 = vmatprep.subr.mxu0 0.0
    %646 = vmatpush1.msra.mxu0 0.0
    %647 = vmatprep.subr.mxu0 0.0
    %648 = vmatpush1.msra.mxu0 0.0
    %649 = vmatprep.subr.mxu0 0.0
    %650 = vmatpush1.msra.mxu0 0.0
    %651 = vmatprep.subr.mxu0 0.0
    %652 = vmatpush1.msra.mxu0 0.0
    %653 = vmatprep.subr.mxu0 0.0
    %654 = vmatpush1.msra.mxu0 0.0
    %655 = vmatprep.mubr.f32.mxu0 0.0
    %656 = vmatmul.mubr.f32.gmra.mrb[0].mxu0 %v589
    %v657 = vpop.f32.mrb[0].mxu0
    %v658 = vadd.f32 0.0, %v657
    %v659 = vpop.f32.mrb[0].mxu0
    %660 = vdwg.mxu0
    %662 = vrot.lane.b32.xlu0 %v658, 16
    %v663 = vpop.permute.xlu0 %662
    %vm665 = vcmask 195712
    %666 = vst.msk [vmem:[#allocation2] sm:$0xff] %vm665, %v663
    %667 = vrot.lane.b32.xlu0 %v139, 104
    %v668 = vpop.permute.xlu0 %667
    %669 = vrot.lane.b32.xlu0 %v139, 72
    %v670 = vpop.permute.xlu0 %669
    %v671 = vsel %vm156, %v668, 0
    %v673 = vsel %vm156, %v670, 0
    %675 = vmatprep.subr.mxu0 0.0
    %676 = vmatpush1.xpose.msra.mxu0 %v673
    %677 = vmatprep.subr.mxu0 0.0
    %678 = vmatpush1.xpose.msra.mxu0 0.0
    %679 = vmatprep.subr.mxu0 0.0
    %680 = vmatpush1.xpose.msra.mxu0 0.0
    %681 = vmatprep.subr.mxu0 0.0
    %682 = vmatpush1.xpose.msra.mxu0 0.0
    %683 = vmatprep.subr.mxu0 0.0
    %684 = vmatpush1.xpose.msra.mxu0 0.0
    %685 = vmatprep.subr.mxu0 0.0
    %686 = vmatpush1.xpose.msra.mxu0 0.0
    %687 = vmatprep.subr.mxu0 0.0
    %688 = vmatpush1.xpose.msra.mxu0 0.0
    %689 = vmatprep.subr.mxu0 0.0
    %690 = vmatpush1.xpose.msra.mxu0 0.0
    %691 = vmatprep.subr.mxu0 0.0
    %692 = vmatpush1.xpose.msra.mxu0 0.0
    %693 = vmatprep.subr.mxu0 0.0
    %694 = vmatpush1.xpose.msra.mxu0 0.0
    %695 = vmatprep.subr.mxu0 0.0
    %696 = vmatpush1.xpose.msra.mxu0 0.0
    %697 = vmatprep.subr.mxu0 0.0
    %698 = vmatpush1.xpose.msra.mxu0 0.0
    %699 = vmatprep.subr.mxu0 0.0
    %700 = vmatpush1.xpose.msra.mxu0 0.0
    %701 = vmatprep.subr.mxu0 0.0
    %702 = vmatpush1.xpose.msra.mxu0 0.0
    %703 = vmatprep.subr.mxu0 0.0
    %704 = vmatpush1.xpose.msra.mxu0 0.0
    %705 = vmatprep.subr.mxu0 0.0
    %706 = vmatpush1.xpose.msra.mxu0 0.0
    %707 = vmatprep.subr.mxu0 0.0
    %708 = vmatpush1.xpose.msra.mxu0 0.0
    %709 = vmatprep.subr.mxu0 0.0
    %710 = vmatpush1.xpose.msra.mxu0 0.0
    %711 = vmatprep.subr.mxu0 0.0
    %712 = vmatpush1.xpose.msra.mxu0 0.0
    %713 = vmatprep.subr.mxu0 0.0
    %714 = vmatpush1.xpose.msra.mxu0 0.0
    %715 = vmatprep.subr.mxu0 0.0
    %716 = vmatpush1.xpose.msra.mxu0 0.0
    %717 = vmatprep.subr.mxu0 0.0
    %718 = vmatpush1.xpose.msra.mxu0 0.0
    %719 = vmatprep.subr.mxu0 0.0
    %720 = vmatpush1.xpose.msra.mxu0 0.0
    %721 = vmatprep.subr.mxu0 0.0
    %722 = vmatpush1.xpose.msra.mxu0 0.0
    %723 = vmatprep.subr.mxu0 0.0
    %724 = vmatpush1.xpose.msra.mxu0 0.0
    %725 = vmatprep.subr.mxu0 0.0
    %726 = vmatpush1.xpose.msra.mxu0 0.0
    %727 = vmatprep.subr.mxu0 0.0
    %728 = vmatpush1.xpose.msra.mxu0 0.0
    %729 = vmatprep.subr.mxu0 0.0
    %730 = vmatpush1.xpose.msra.mxu0 0.0
    %731 = vmatprep.subr.mxu0 0.0
    %732 = vmatpush1.xpose.msra.mxu0 0.0
    %733 = vmatprep.subr.mxu0 0.0
    %734 = vmatpush1.xpose.msra.mxu0 0.0
    %735 = vmatprep.subr.mxu0 0.0
    %736 = vmatpush1.xpose.msra.mxu0 0.0
    %737 = vmatprep.subr.mxu0 0.0
    %738 = vmatpush1.xpose.msra.mxu0 0.0
    %739 = vmatprep.mubr.f32.mxu0 0.0
    %740 = vmatmul.mubr.f32.gmra.mrb[0].mxu0 %v671
    %v741 = vpop.f32.mrb[0].mxu0
    %v742 = vadd.f32 0.0, %v741
    %v743 = vpop.f32.mrb[0].mxu0
    %744 = vdwg.mxu0
    %v745 = vmul.f32 %v742, 0.35355338
    %v746 = vadd.f32 %v745, %v152
    %v747 = vsel %vm156, %v746, -inf
    %748 = vmax.xlane.f32.xlu0 %v747
    %v749 = vpop.xlane.xlu0 %748
    %v750 = vsub.f32 %v746, %v749
    %v751 = vmul.f32 %v750, 1.442695
    %v752 = vpow.pop %v751
    %v753 = vsel %vm156, %v752, 0.0
    %754 = vadd.xlane.f32.xlu0 %v753
    %v755 = vpop.xlane.xlu0 %754
    %v756 = vrcp.pop %v755
    %v757 = vmul.f32 %v752, %v756
    %758 = vrot.lane.b32.xlu0 %v139, 40
    %v759 = vpop.permute.xlu0 %758
    %v762 = vsel %vm156, %v757, 0
    %764 = vmatprep.subr.mxu0 0.0
    %765 = vmatpush1.msra.mxu0 %v759
    %766 = vmatprep.subr.mxu0 0.0
    %767 = vmatpush1.msra.mxu0 0.0
    %768 = vmatprep.subr.mxu0 0.0
    %769 = vmatpush1.msra.mxu0 0.0
    %770 = vmatprep.subr.mxu0 0.0
    %771 = vmatpush1.msra.mxu0 0.0
    %772 = vmatprep.subr.mxu0 0.0
    %773 = vmatpush1.msra.mxu0 0.0
    %774 = vmatprep.subr.mxu0 0.0
    %775 = vmatpush1.msra.mxu0 0.0
    %776 = vmatprep.subr.mxu0 0.0
    %777 = vmatpush1.msra.mxu0 0.0
    %778 = vmatprep.subr.mxu0 0.0
    %779 = vmatpush1.msra.mxu0 0.0
    %780 = vmatprep.subr.mxu0 0.0
    %781 = vmatpush1.msra.mxu0 0.0
    %782 = vmatprep.subr.mxu0 0.0
    %783 = vmatpush1.msra.mxu0 0.0
    %784 = vmatprep.subr.mxu0 0.0
    %785 = vmatpush1.msra.mxu0 0.0
    %786 = vmatprep.subr.mxu0 0.0
    %787 = vmatpush1.msra.mxu0 0.0
    %788 = vmatprep.subr.mxu0 0.0
    %789 = vmatpush1.msra.mxu0 0.0
    %790 = vmatprep.subr.mxu0 0.0
    %791 = vmatpush1.msra.mxu0 0.0
    %792 = vmatprep.subr.mxu0 0.0
    %793 = vmatpush1.msra.mxu0 0.0
    %794 = vmatprep.subr.mxu0 0.0
    %795 = vmatpush1.msra.mxu0 0.0
    %796 = vmatprep.subr.mxu0 0.0
    %797 = vmatpush1.msra.mxu0 0.0
    %798 = vmatprep.subr.mxu0 0.0
    %799 = vmatpush1.msra.mxu0 0.0
    %800 = vmatprep.subr.mxu0 0.0
    %801 = vmatpush1.msra.mxu0 0.0
    %802 = vmatprep.subr.mxu0 0.0
    %803 = vmatpush1.msra.mxu0 0.0
    %804 = vmatprep.subr.mxu0 0.0
    %805 = vmatpush1.msra.mxu0 0.0
    %806 = vmatprep.subr.mxu0 0.0
    %807 = vmatpush1.msra.mxu0 0.0
    %808 = vmatprep.subr.mxu0 0.0
    %809 = vmatpush1.msra.mxu0 0.0
    %810 = vmatprep.subr.mxu0 0.0
    %811 = vmatpush1.msra.mxu0 0.0
    %812 = vmatprep.subr.mxu0 0.0
    %813 = vmatpush1.msra.mxu0 0.0
    %814 = vmatprep.subr.mxu0 0.0
    %815 = vmatpush1.msra.mxu0 0.0
    %816 = vmatprep.subr.mxu0 0.0
    %817 = vmatpush1.msra.mxu0 0.0
    %818 = vmatprep.subr.mxu0 0.0
    %819 = vmatpush1.msra.mxu0 0.0
    %820 = vmatprep.subr.mxu0 0.0
    %821 = vmatpush1.msra.mxu0 0.0
    %822 = vmatprep.subr.mxu0 0.0
    %823 = vmatpush1.msra.mxu0 0.0
    %824 = vmatprep.subr.mxu0 0.0
    %825 = vmatpush1.msra.mxu0 0.0
    %826 = vmatprep.subr.mxu0 0.0
    %827 = vmatpush1.msra.mxu0 0.0
    %828 = vmatprep.mubr.f32.mxu0 0.0
    %829 = vmatmul.mubr.f32.gmra.mrb[0].mxu0 %v762
    %v830 = vpop.f32.mrb[0].mxu0
    %v831 = vadd.f32 0.0, %v830
    %v832 = vpop.f32.mrb[0].mxu0
    %833 = vdwg.mxu0
    %835 = vrot.lane.b32.xlu0 %v831, 24
    %v836 = vpop.permute.xlu0 %835
    %vm838 = vcmask 261312
    %839 = vst.msk [vmem:[#allocation2] sm:$0xff] %vm838, %v836
    %841 = vrot.lane.b32.xlu0 %v144, 96
    %v842 = vpop.permute.xlu0 %841
    %v843 = vsel %vm156, %v144, 0
    %v845 = vsel %vm156, %v842, 0
    %847 = vmatprep.subr.mxu0 0.0
    %848 = vmatpush1.xpose.msra.mxu0 %v845
    %849 = vmatprep.subr.mxu0 0.0
    %850 = vmatpush1.xpose.msra.mxu0 0.0
    %851 = vmatprep.subr.mxu0 0.0
    %852 = vmatpush1.xpose.msra.mxu0 0.0
    %853 = vmatprep.subr.mxu0 0.0
    %854 = vmatpush1.xpose.msra.mxu0 0.0
    %855 = vmatprep.subr.mxu0 0.0
    %856 = vmatpush1.xpose.msra.mxu0 0.0
    %857 = vmatprep.subr.mxu0 0.0
    %858 = vmatpush1.xpose.msra.mxu0 0.0
    %859 = vmatprep.subr.mxu0 0.0
    %860 = vmatpush1.xpose.msra.mxu0 0.0
    %861 = vmatprep.subr.mxu0 0.0
    %862 = vmatpush1.xpose.msra.mxu0 0.0
    %863 = vmatprep.subr.mxu0 0.0
    %864 = vmatpush1.xpose.msra.mxu0 0.0
    %865 = vmatprep.subr.mxu0 0.0
    %866 = vmatpush1.xpose.msra.mxu0 0.0
    %867 = vmatprep.subr.mxu0 0.0
    %868 = vmatpush1.xpose.msra.mxu0 0.0
    %869 = vmatprep.subr.mxu0 0.0
    %870 = vmatpush1.xpose.msra.mxu0 0.0
    %871 = vmatprep.subr.mxu0 0.0
    %872 = vmatpush1.xpose.msra.mxu0 0.0
    %873 = vmatprep.subr.mxu0 0.0
    %874 = vmatpush1.xpose.msra.mxu0 0.0
    %875 = vmatprep.subr.mxu0 0.0
    %876 = vmatpush1.xpose.msra.mxu0 0.0
    %877 = vmatprep.subr.mxu0 0.0
    %878 = vmatpush1.xpose.msra.mxu0 0.0
    %879 = vmatprep.subr.mxu0 0.0
    %880 = vmatpush1.xpose.msra.mxu0 0.0
    %881 = vmatprep.subr.mxu0 0.0
    %882 = vmatpush1.xpose.msra.mxu0 0.0
    %883 = vmatprep.subr.mxu0 0.0
    %884 = vmatpush1.xpose.msra.mxu0 0.0
    %885 = vmatprep.subr.mxu0 0.0
    %886 = vmatpush1.xpose.msra.mxu0 0.0
    %887 = vmatprep.subr.mxu0 0.0
    %888 = vmatpush1.xpose.msra.mxu0 0.0
    %889 = vmatprep.subr.mxu0 0.0
    %890 = vmatpush1.xpose.msra.mxu0 0.0
    %891 = vmatprep.subr.mxu0 0.0
    %892 = vmatpush1.xpose.msra.mxu0 0.0
    %893 = vmatprep.subr.mxu0 0.0
    %894 = vmatpush1.xpose.msra.mxu0 0.0
    %895 = vmatprep.subr.mxu0 0.0
    %896 = vmatpush1.xpose.msra.mxu0 0.0
    %897 = vmatprep.subr.mxu0 0.0
    %898 = vmatpush1.xpose.msra.mxu0 0.0
    %899 = vmatprep.subr.mxu0 0.0
    %900 = vmatpush1.xpose.msra.mxu0 0.0
    %901 = vmatprep.subr.mxu0 0.0
    %902 = vmatpush1.xpose.msra.mxu0 0.0
    %903 = vmatprep.subr.mxu0 0.0
    %904 = vmatpush1.xpose.msra.mxu0 0.0
    %905 = vmatprep.subr.mxu0 0.0
    %906 = vmatpush1.xpose.msra.mxu0 0.0
    %907 = vmatprep.subr.mxu0 0.0
    %908 = vmatpush1.xpose.msra.mxu0 0.0
    %909 = vmatprep.subr.mxu0 0.0
    %910 = vmatpush1.xpose.msra.mxu0 0.0
    %911 = vmatprep.mubr.f32.mxu0 0.0
    %912 = vmatmul.mubr.f32.gmra.mrb[0].mxu0 %v843
    %v913 = vpop.f32.mrb[0].mxu0
    %v914 = vadd.f32 0.0, %v913
    %v915 = vpop.f32.mrb[0].mxu0
    %916 = vdwg.mxu0
    %v917 = vmul.f32 %v914, 0.35355338
    %v918 = vadd.f32 %v917, %v152
    %v919 = vsel %vm156, %v918, -inf
    %920 = vmax.xlane.f32.xlu0 %v919
    %v921 = vpop.xlane.xlu0 %920
    %v922 = vsub.f32 %v918, %v921
    %v923 = vmul.f32 %v922, 1.442695
    %v924 = vpow.pop %v923
    %v925 = vsel %vm156, %v924, 0.0
    %926 = vadd.xlane.f32.xlu0 %v925
    %v927 = vpop.xlane.xlu0 %926
    %v928 = vrcp.pop %v927
    %v929 = vmul.f32 %v924, %v928
    %930 = vrot.lane.b32.xlu0 %v144, 64
    %v931 = vpop.permute.xlu0 %930
    %v934 = vsel %vm156, %v929, 0
    %936 = vmatprep.subr.mxu0 0.0
    %937 = vmatpush1.msra.mxu0 %v931
    %938 = vmatprep.subr.mxu0 0.0
    %939 = vmatpush1.msra.mxu0 0.0
    %940 = vmatprep.subr.mxu0 0.0
    %941 = vmatpush1.msra.mxu0 0.0
    %942 = vmatprep.subr.mxu0 0.0
    %943 = vmatpush1.msra.mxu0 0.0
    %944 = vmatprep.subr.mxu0 0.0
    %945 = vmatpush1.msra.mxu0 0.0
    %946 = vmatprep.subr.mxu0 0.0
    %947 = vmatpush1.msra.mxu0 0.0
    %948 = vmatprep.subr.mxu0 0.0
    %949 = vmatpush1.msra.mxu0 0.0
    %950 = vmatprep.subr.mxu0 0.0
    %951 = vmatpush1.msra.mxu0 0.0
    %952 = vmatprep.subr.mxu0 0.0
    %953 = vmatpush1.msra.mxu0 0.0
    %954 = vmatprep.subr.mxu0 0.0
    %955 = vmatpush1.msra.mxu0 0.0
    %956 = vmatprep.subr.mxu0 0.0
    %957 = vmatpush1.msra.mxu0 0.0
    %958 = vmatprep.subr.mxu0 0.0
    %959 = vmatpush1.msra.mxu0 0.0
    %960 = vmatprep.subr.mxu0 0.0
    %961 = vmatpush1.msra.mxu0 0.0
    %962 = vmatprep.subr.mxu0 0.0
    %963 = vmatpush1.msra.mxu0 0.0
    %964 = vmatprep.subr.mxu0 0.0
    %965 = vmatpush1.msra.mxu0 0.0
    %966 = vmatprep.subr.mxu0 0.0
    %967 = vmatpush1.msra.mxu0 0.0
    %968 = vmatprep.subr.mxu0 0.0
    %969 = vmatpush1.msra.mxu0 0.0
    %970 = vmatprep.subr.mxu0 0.0
    %971 = vmatpush1.msra.mxu0 0.0
    %972 = vmatprep.subr.mxu0 0.0
    %973 = vmatpush1.msra.mxu0 0.0
    %974 = vmatprep.subr.mxu0 0.0
    %975 = vmatpush1.msra.mxu0 0.0
    %976 = vmatprep.subr.mxu0 0.0
    %977 = vmatpush1.msra.mxu0 0.0
    %978 = vmatprep.subr.mxu0 0.0
    %979 = vmatpush1.msra.mxu0 0.0
    %980 = vmatprep.subr.mxu0 0.0
    %981 = vmatpush1.msra.mxu0 0.0
    %982 = vmatprep.subr.mxu0 0.0
    %983 = vmatpush1.msra.mxu0 0.0
    %984 = vmatprep.subr.mxu0 0.0
    %985 = vmatpush1.msra.mxu0 0.0
    %986 = vmatprep.subr.mxu0 0.0
    %987 = vmatpush1.msra.mxu0 0.0
    %988 = vmatprep.subr.mxu0 0.0
    %989 = vmatpush1.msra.mxu0 0.0
    %990 = vmatprep.subr.mxu0 0.0
    %991 = vmatpush1.msra.mxu0 0.0
    %992 = vmatprep.subr.mxu0 0.0
    %993 = vmatpush1.msra.mxu0 0.0
    %994 = vmatprep.subr.mxu0 0.0
    %995 = vmatpush1.msra.mxu0 0.0
    %996 = vmatprep.subr.mxu0 0.0
    %997 = vmatpush1.msra.mxu0 0.0
    %998 = vmatprep.subr.mxu0 0.0
    %999 = vmatpush1.msra.mxu0 0.0
    %1000 = vmatprep.mubr.f32.mxu0 0.0
    %1001 = vmatmul.mubr.f32.gmra.mrb[0].mxu0 %v934
    %v1002 = vpop.f32.mrb[0].mxu0
    %v1003 = vadd.f32 0.0, %v1002
    %v1004 = vpop.f32.mrb[0].mxu0
    %1005 = vdwg.mxu0
    %1006 = vst.msk [vmem:[#allocation2 + $0x8] sm:$0xff] %vm156, %v1003
    %1007 = vrot.lane.b32.xlu0 %v144, 120
    %v1008 = vpop.permute.xlu0 %1007
    %1009 = vrot.lane.b32.xlu0 %v144, 88
    %v1010 = vpop.permute.xlu0 %1009
    %v1011 = vsel %vm156, %v1008, 0
    %v1013 = vsel %vm156, %v1010, 0
    %1015 = vmatprep.subr.mxu0 0.0
    %1016 = vmatpush1.xpose.msra.mxu0 %v1013
    %1017 = vmatprep.subr.mxu0 0.0
    %1018 = vmatpush1.xpose.msra.mxu0 0.0
    %1019 = vmatprep.subr.mxu0 0.0
    %1020 = vmatpush1.xpose.msra.mxu0 0.0
    %1021 = vmatprep.subr.mxu0 0.0
    %1022 = vmatpush1.xpose.msra.mxu0 0.0
    %1023 = vmatprep.subr.mxu0 0.0
    %1024 = vmatpush1.xpose.msra.mxu0 0.0
    %1025 = vmatprep.subr.mxu0 0.0
    %1026 = vmatpush1.xpose.msra.mxu0 0.0
    %1027 = vmatprep.subr.mxu0 0.0
    %1028 = vmatpush1.xpose.msra.mxu0 0.0
    %1029 = vmatprep.subr.mxu0 0.0
    %1030 = vmatpush1.xpose.msra.mxu0 0.0
    %1031 = vmatprep.subr.mxu0 0.0
    %1032 = vmatpush1.xpose.msra.mxu0 0.0
    %1033 = vmatprep.subr.mxu0 0.0
    %1034 = vmatpush1.xpose.msra.mxu0 0.0
    %1035 = vmatprep.subr.mxu0 0.0
    %1036 = vmatpush1.xpose.msra.mxu0 0.0
    %1037 = vmatprep.subr.mxu0 0.0
    %1038 = vmatpush1.xpose.msra.mxu0 0.0
    %1039 = vmatprep.subr.mxu0 0.0
    %1040 = vmatpush1.xpose.msra.mxu0 0.0
    %1041 = vmatprep.subr.mxu0 0.0
    %1042 = vmatpush1.xpose.msra.mxu0 0.0
    %1043 = vmatprep.subr.mxu0 0.0
    %1044 = vmatpush1.xpose.msra.mxu0 0.0
    %1045 = vmatprep.subr.mxu0 0.0
    %1046 = vmatpush1.xpose.msra.mxu0 0.0
    %1047 = vmatprep.subr.mxu0 0.0
    %1048 = vmatpush1.xpose.msra.mxu0 0.0
    %1049 = vmatprep.subr.mxu0 0.0
    %1050 = vmatpush1.xpose.msra.mxu0 0.0
    %1051 = vmatprep.subr.mxu0 0.0
    %1052 = vmatpush1.xpose.msra.mxu0 0.0
    %1053 = vmatprep.subr.mxu0 0.0
    %1054 = vmatpush1.xpose.msra.mxu0 0.0
    %1055 = vmatprep.subr.mxu0 0.0
    %1056 = vmatpush1.xpose.msra.mxu0 0.0
    %1057 = vmatprep.subr.mxu0 0.0
    %1058 = vmatpush1.xpose.msra.mxu0 0.0
    %1059 = vmatprep.subr.mxu0 0.0
    %1060 = vmatpush1.xpose.msra.mxu0 0.0
    %1061 = vmatprep.subr.mxu0 0.0
    %1062 = vmatpush1.xpose.msra.mxu0 0.0
    %1063 = vmatprep.subr.mxu0 0.0
    %1064 = vmatpush1.xpose.msra.mxu0 0.0
    %1065 = vmatprep.subr.mxu0 0.0
    %1066 = vmatpush1.xpose.msra.mxu0 0.0
    %1067 = vmatprep.subr.mxu0 0.0
    %1068 = vmatpush1.xpose.msra.mxu0 0.0
    %1069 = vmatprep.subr.mxu0 0.0
    %1070 = vmatpush1.xpose.msra.mxu0 0.0
    %1071 = vmatprep.subr.mxu0 0.0
    %1072 = vmatpush1.xpose.msra.mxu0 0.0
    %1073 = vmatprep.subr.mxu0 0.0
    %1074 = vmatpush1.xpose.msra.mxu0 0.0
    %1075 = vmatprep.subr.mxu0 0.0
    %1076 = vmatpush1.xpose.msra.mxu0 0.0
    %1077 = vmatprep.subr.mxu0 0.0
    %1078 = vmatpush1.xpose.msra.mxu0 0.0
    %1079 = vmatprep.mubr.f32.mxu0 0.0
    %1080 = vmatmul.mubr.f32.gmra.mrb[0].mxu0 %v1011
    %v1081 = vpop.f32.mrb[0].mxu0
    %v1082 = vadd.f32 0.0, %v1081
    %v1083 = vpop.f32.mrb[0].mxu0
    %1084 = vdwg.mxu0
    %v1085 = vmul.f32 %v1082, 0.35355338
    %v1086 = vadd.f32 %v1085, %v152
    %v1087 = vsel %vm156, %v1086, -inf
    %1088 = vmax.xlane.f32.xlu0 %v1087
    %v1089 = vpop.xlane.xlu0 %1088
    %v1090 = vsub.f32 %v1086, %v1089
    %v1091 = vmul.f32 %v1090, 1.442695
    %v1092 = vpow.pop %v1091
    %v1093 = vsel %vm156, %v1092, 0.0
    %1094 = vadd.xlane.f32.xlu0 %v1093
    %v1095 = vpop.xlane.xlu0 %1094
    %v1096 = vrcp.pop %v1095
    %v1097 = vmul.f32 %v1092, %v1096
    %1098 = vrot.lane.b32.xlu0 %v144, 56
    %v1099 = vpop.permute.xlu0 %1098
    %v1102 = vsel %vm156, %v1097, 0
    %1104 = vmatprep.subr.mxu0 0.0
    %1105 = vmatpush1.msra.mxu0 %v1099
    %1106 = vmatprep.subr.mxu0 0.0
    %1107 = vmatpush1.msra.mxu0 0.0
    %1108 = vmatprep.subr.mxu0 0.0
    %1109 = vmatpush1.msra.mxu0 0.0
    %1110 = vmatprep.subr.mxu0 0.0
    %1111 = vmatpush1.msra.mxu0 0.0
    %1112 = vmatprep.subr.mxu0 0.0
    %1113 = vmatpush1.msra.mxu0 0.0
    %1114 = vmatprep.subr.mxu0 0.0
    %1115 = vmatpush1.msra.mxu0 0.0
    %1116 = vmatprep.subr.mxu0 0.0
    %1117 = vmatpush1.msra.mxu0 0.0
    %1118 = vmatprep.subr.mxu0 0.0
    %1119 = vmatpush1.msra.mxu0 0.0
    %1120 = vmatprep.subr.mxu0 0.0
    %1121 = vmatpush1.msra.mxu0 0.0
    %1122 = vmatprep.subr.mxu0 0.0
    %1123 = vmatpush1.msra.mxu0 0.0
    %1124 = vmatprep.subr.mxu0 0.0
    %1125 = vmatpush1.msra.mxu0 0.0
    %1126 = vmatprep.subr.mxu0 0.0
    %1127 = vmatpush1.msra.mxu0 0.0
    %1128 = vmatprep.subr.mxu0 0.0
    %1129 = vmatpush1.msra.mxu0 0.0
    %1130 = vmatprep.subr.mxu0 0.0
    %1131 = vmatpush1.msra.mxu0 0.0
    %1132 = vmatprep.subr.mxu0 0.0
    %1133 = vmatpush1.msra.mxu0 0.0
    %1134 = vmatprep.subr.mxu0 0.0
    %1135 = vmatpush1.msra.mxu0 0.0
    %1136 = vmatprep.subr.mxu0 0.0
    %1137 = vmatpush1.msra.mxu0 0.0
    %1138 = vmatprep.subr.mxu0 0.0
    %1139 = vmatpush1.msra.mxu0 0.0
    %1140 = vmatprep.subr.mxu0 0.0
    %1141 = vmatpush1.msra.mxu0 0.0
    %1142 = vmatprep.subr.mxu0 0.0
    %1143 = vmatpush1.msra.mxu0 0.0
    %1144 = vmatprep.subr.mxu0 0.0
    %1145 = vmatpush1.msra.mxu0 0.0
    %1146 = vmatprep.subr.mxu0 0.0
    %1147 = vmatpush1.msra.mxu0 0.0
    %1148 = vmatprep.subr.mxu0 0.0
    %1149 = vmatpush1.msra.mxu0 0.0
    %1150 = vmatprep.subr.mxu0 0.0
    %1151 = vmatpush1.msra.mxu0 0.0
    %1152 = vmatprep.subr.mxu0 0.0
    %1153 = vmatpush1.msra.mxu0 0.0
    %1154 = vmatprep.subr.mxu0 0.0
    %1155 = vmatpush1.msra.mxu0 0.0
    %1156 = vmatprep.subr.mxu0 0.0
    %1157 = vmatpush1.msra.mxu0 0.0
    %1158 = vmatprep.subr.mxu0 0.0
    %1159 = vmatpush1.msra.mxu0 0.0
    %1160 = vmatprep.subr.mxu0 0.0
    %1161 = vmatpush1.msra.mxu0 0.0
    %1162 = vmatprep.subr.mxu0 0.0
    %1163 = vmatpush1.msra.mxu0 0.0
    %1164 = vmatprep.subr.mxu0 0.0
    %1165 = vmatpush1.msra.mxu0 0.0
    %1166 = vmatprep.subr.mxu0 0.0
    %1167 = vmatpush1.msra.mxu0 0.0
    %1168 = vmatprep.mubr.f32.mxu0 0.0
    %1169 = vmatmul.mubr.f32.gmra.mrb[0].mxu0 %v1102
    %v1170 = vpop.f32.mrb[0].mxu0
    %v1171 = vadd.f32 0.0, %v1170
    %v1172 = vpop.f32.mrb[0].mxu0
    %1173 = vdwg.mxu0
    %1175 = vrot.lane.b32.xlu0 %v1171, 8
    %v1176 = vpop.permute.xlu0 %1175
    %1178 = vst.msk [vmem:[#allocation2 + $0x8] sm:$0xff] %vm492, %v1176
    %1179 = vrot.lane.b32.xlu0 %v144, 112
    %v1180 = vpop.permute.xlu0 %1179
    %1181 = vrot.lane.b32.xlu0 %v144, 80
    %v1182 = vpop.permute.xlu0 %1181
    %v1183 = vsel %vm156, %v1180, 0
    %v1185 = vsel %vm156, %v1182, 0
    %1187 = vmatprep.subr.mxu0 0.0
    %1188 = vmatpush1.xpose.msra.mxu0 %v1185
    %1189 = vmatprep.subr.mxu0 0.0
    %1190 = vmatpush1.xpose.msra.mxu0 0.0
    %1191 = vmatprep.subr.mxu0 0.0
    %1192 = vmatpush1.xpose.msra.mxu0 0.0
    %1193 = vmatprep.subr.mxu0 0.0
    %1194 = vmatpush1.xpose.msra.mxu0 0.0
    %1195 = vmatprep.subr.mxu0 0.0
    %1196 = vmatpush1.xpose.msra.mxu0 0.0
    %1197 = vmatprep.subr.mxu0 0.0
    %1198 = vmatpush1.xpose.msra.mxu0 0.0
    %1199 = vmatprep.subr.mxu0 0.0
    %1200 = vmatpush1.xpose.msra.mxu0 0.0
    %1201 = vmatprep.subr.mxu0 0.0
    %1202 = vmatpush1.xpose.msra.mxu0 0.0
    %1203 = vmatprep.subr.mxu0 0.0
    %1204 = vmatpush1.xpose.msra.mxu0 0.0
    %1205 = vmatprep.subr.mxu0 0.0
    %1206 = vmatpush1.xpose.msra.mxu0 0.0
    %1207 = vmatprep.subr.mxu0 0.0
    %1208 = vmatpush1.xpose.msra.mxu0 0.0
    %1209 = vmatprep.subr.mxu0 0.0
    %1210 = vmatpush1.xpose.msra.mxu0 0.0
    %1211 = vmatprep.subr.mxu0 0.0
    %1212 = vmatpush1.xpose.msra.mxu0 0.0
    %1213 = vmatprep.subr.mxu0 0.0
    %1214 = vmatpush1.xpose.msra.mxu0 0.0
    %1215 = vmatprep.subr.mxu0 0.0
    %1216 = vmatpush1.xpose.msra.mxu0 0.0
    %1217 = vmatprep.subr.mxu0 0.0
    %1218 = vmatpush1.xpose.msra.mxu0 0.0
    %1219 = vmatprep.subr.mxu0 0.0
    %1220 = vmatpush1.xpose.msra.mxu0 0.0
    %1221 = vmatprep.subr.mxu0 0.0
    %1222 = vmatpush1.xpose.msra.mxu0 0.0
    %1223 = vmatprep.subr.mxu0 0.0
    %1224 = vmatpush1.xpose.msra.mxu0 0.0
    %1225 = vmatprep.subr.mxu0 0.0
    %1226 = vmatpush1.xpose.msra.mxu0 0.0
    %1227 = vmatprep.subr.mxu0 0.0
    %1228 = vmatpush1.xpose.msra.mxu0 0.0
    %1229 = vmatprep.subr.mxu0 0.0
    %1230 = vmatpush1.xpose.msra.mxu0 0.0
    %1231 = vmatprep.subr.mxu0 0.0
    %1232 = vmatpush1.xpose.msra.mxu0 0.0
    %1233 = vmatprep.subr.mxu0 0.0
    %1234 = vmatpush1.xpose.msra.mxu0 0.0
    %1235 = vmatprep.subr.mxu0 0.0
    %1236 = vmatpush1.xpose.msra.mxu0 0.0
    %1237 = vmatprep.subr.mxu0 0.0
    %1238 = vmatpush1.xpose.msra.mxu0 0.0
    %1239 = vmatprep.subr.mxu0 0.0
    %1240 = vmatpush1.xpose.msra.mxu0 0.0
    %1241 = vmatprep.subr.mxu0 0.0
    %1242 = vmatpush1.xpose.msra.mxu0 0.0
    %1243 = vmatprep.subr.mxu0 0.0
    %1244 = vmatpush1.xpose.msra.mxu0 0.0
    %1245 = vmatprep.subr.mxu0 0.0
    %1246 = vmatpush1.xpose.msra.mxu0 0.0
    %1247 = vmatprep.subr.mxu0 0.0
    %1248 = vmatpush1.xpose.msra.mxu0 0.0
    %1249 = vmatprep.subr.mxu0 0.0
    %1250 = vmatpush1.xpose.msra.mxu0 0.0
    %1251 = vmatprep.mubr.f32.mxu0 0.0
    %1252 = vmatmul.mubr.f32.gmra.mrb[0].mxu0 %v1183
    %v1253 = vpop.f32.mrb[0].mxu0
    %v1254 = vadd.f32 0.0, %v1253
    %v1255 = vpop.f32.mrb[0].mxu0
    %1256 = vdwg.mxu0
    %v1257 = vmul.f32 %v1254, 0.35355338
    %v1258 = vadd.f32 %v1257, %v152
    %v1259 = vsel %vm156, %v1258, -inf
    %1260 = vmax.xlane.f32.xlu0 %v1259
    %v1261 = vpop.xlane.xlu0 %1260
    %v1262 = vsub.f32 %v1258, %v1261
    %v1263 = vmul.f32 %v1262, 1.442695
    %v1264 = vpow.pop %v1263
    %v1265 = vsel %vm156, %v1264, 0.0
    %1266 = vadd.xlane.f32.xlu0 %v1265
    %v1267 = vpop.xlane.xlu0 %1266
    %v1268 = vrcp.pop %v1267
    %v1269 = vmul.f32 %v1264, %v1268
    %1270 = vrot.lane.b32.xlu0 %v144, 48
    %v1271 = vpop.permute.xlu0 %1270
    %v1274 = vsel %vm156, %v1269, 0
    %1276 = vmatprep.subr.mxu0 0.0
    %1277 = vmatpush1.msra.mxu0 %v1271
    %1278 = vmatprep.subr.mxu0 0.0
    %1279 = vmatpush1.msra.mxu0 0.0
    %1280 = vmatprep.subr.mxu0 0.0
    %1281 = vmatpush1.msra.mxu0 0.0
    %1282 = vmatprep.subr.mxu0 0.0
    %1283 = vmatpush1.msra.mxu0 0.0
    %1284 = vmatprep.subr.mxu0 0.0
    %1285 = vmatpush1.msra.mxu0 0.0
    %1286 = vmatprep.subr.mxu0 0.0
    %1287 = vmatpush1.msra.mxu0 0.0
    %1288 = vmatprep.subr.mxu0 0.0
    %1289 = vmatpush1.msra.mxu0 0.0
    %1290 = vmatprep.subr.mxu0 0.0
    %1291 = vmatpush1.msra.mxu0 0.0
    %1292 = vmatprep.subr.mxu0 0.0
    %1293 = vmatpush1.msra.mxu0 0.0
    %1294 = vmatprep.subr.mxu0 0.0
    %1295 = vmatpush1.msra.mxu0 0.0
    %1296 = vmatprep.subr.mxu0 0.0
    %1297 = vmatpush1.msra.mxu0 0.0
    %1298 = vmatprep.subr.mxu0 0.0
    %1299 = vmatpush1.msra.mxu0 0.0
    %1300 = vmatprep.subr.mxu0 0.0
    %1301 = vmatpush1.msra.mxu0 0.0
    %1302 = vmatprep.subr.mxu0 0.0
    %1303 = vmatpush1.msra.mxu0 0.0
    %1304 = vmatprep.subr.mxu0 0.0
    %1305 = vmatpush1.msra.mxu0 0.0
    %1306 = vmatprep.subr.mxu0 0.0
    %1307 = vmatpush1.msra.mxu0 0.0
    %1308 = vmatprep.subr.mxu0 0.0
    %1309 = vmatpush1.msra.mxu0 0.0
    %1310 = vmatprep.subr.mxu0 0.0
    %1311 = vmatpush1.msra.mxu0 0.0
    %1312 = vmatprep.subr.mxu0 0.0
    %1313 = vmatpush1.msra.mxu0 0.0
    %1314 = vmatprep.subr.mxu0 0.0
    %1315 = vmatpush1.msra.mxu0 0.0
    %1316 = vmatprep.subr.mxu0 0.0
    %1317 = vmatpush1.msra.mxu0 0.0
    %1318 = vmatprep.subr.mxu0 0.0
    %1319 = vmatpush1.msra.mxu0 0.0
    %1320 = vmatprep.subr.mxu0 0.0
    %1321 = vmatpush1.msra.mxu0 0.0
    %1322 = vmatprep.subr.mxu0 0.0
    %1323 = vmatpush1.msra.mxu0 0.0
    %1324 = vmatprep.subr.mxu0 0.0
    %1325 = vmatpush1.msra.mxu0 0.0
    %1326 = vmatprep.subr.mxu0 0.0
    %1327 = vmatpush1.msra.mxu0 0.0
    %1328 = vmatprep.subr.mxu0 0.0
    %1329 = vmatpush1.msra.mxu0 0.0
    %1330 = vmatprep.subr.mxu0 0.0
    %1331 = vmatpush1.msra.mxu0 0.0
    %1332 = vmatprep.subr.mxu0 0.0
    %1333 = vmatpush1.msra.mxu0 0.0
    %1334 = vmatprep.subr.mxu0 0.0
    %1335 = vmatpush1.msra.mxu0 0.0
    %1336 = vmatprep.subr.mxu0 0.0
    %1337 = vmatpush1.msra.mxu0 0.0
    %1338 = vmatprep.subr.mxu0 0.0
    %1339 = vmatpush1.msra.mxu0 0.0
    %1340 = vmatprep.mubr.f32.mxu0 0.0
    %1341 = vmatmul.mubr.f32.gmra.mrb[0].mxu0 %v1274
    %v1342 = vpop.f32.mrb[0].mxu0
    %v1343 = vadd.f32 0.0, %v1342
    %v1344 = vpop.f32.mrb[0].mxu0
    %1345 = vdwg.mxu0
    %1347 = vrot.lane.b32.xlu0 %v1343, 16
    %v1348 = vpop.permute.xlu0 %1347
    %1350 = vst.msk [vmem:[#allocation2 + $0x8] sm:$0xff] %vm665, %v1348
    %1351 = vrot.lane.b32.xlu0 %v144, 104
    %v1352 = vpop.permute.xlu0 %1351
    %1353 = vrot.lane.b32.xlu0 %v144, 72
    %v1354 = vpop.permute.xlu0 %1353
    %v1355 = vsel %vm156, %v1352, 0
    %v1357 = vsel %vm156, %v1354, 0
    %1359 = vmatprep.subr.mxu0 0.0
    %1360 = vmatpush1.xpose.msra.mxu0 %v1357
    %1361 = vmatprep.subr.mxu0 0.0
    %1362 = vmatpush1.xpose.msra.mxu0 0.0
    %1363 = vmatprep.subr.mxu0 0.0
    %1364 = vmatpush1.xpose.msra.mxu0 0.0
    %1365 = vmatprep.subr.mxu0 0.0
    %1366 = vmatpush1.xpose.msra.mxu0 0.0
    %1367 = vmatprep.subr.mxu0 0.0
    %1368 = vmatpush1.xpose.msra.mxu0 0.0
    %1369 = vmatprep.subr.mxu0 0.0
    %1370 = vmatpush1.xpose.msra.mxu0 0.0
    %1371 = vmatprep.subr.mxu0 0.0
    %1372 = vmatpush1.xpose.msra.mxu0 0.0
    %1373 = vmatprep.subr.mxu0 0.0
    %1374 = vmatpush1.xpose.msra.mxu0 0.0
    %1375 = vmatprep.subr.mxu0 0.0
    %1376 = vmatpush1.xpose.msra.mxu0 0.0
    %1377 = vmatprep.subr.mxu0 0.0
    %1378 = vmatpush1.xpose.msra.mxu0 0.0
    %1379 = vmatprep.subr.mxu0 0.0
    %1380 = vmatpush1.xpose.msra.mxu0 0.0
    %1381 = vmatprep.subr.mxu0 0.0
    %1382 = vmatpush1.xpose.msra.mxu0 0.0
    %1383 = vmatprep.subr.mxu0 0.0
    %1384 = vmatpush1.xpose.msra.mxu0 0.0
    %1385 = vmatprep.subr.mxu0 0.0
    %1386 = vmatpush1.xpose.msra.mxu0 0.0
    %1387 = vmatprep.subr.mxu0 0.0
    %1388 = vmatpush1.xpose.msra.mxu0 0.0
    %1389 = vmatprep.subr.mxu0 0.0
    %1390 = vmatpush1.xpose.msra.mxu0 0.0
    %1391 = vmatprep.subr.mxu0 0.0
    %1392 = vmatpush1.xpose.msra.mxu0 0.0
    %1393 = vmatprep.subr.mxu0 0.0
    %1394 = vmatpush1.xpose.msra.mxu0 0.0
    %1395 = vmatprep.subr.mxu0 0.0
    %1396 = vmatpush1.xpose.msra.mxu0 0.0
    %1397 = vmatprep.subr.mxu0 0.0
    %1398 = vmatpush1.xpose.msra.mxu0 0.0
    %1399 = vmatprep.subr.mxu0 0.0
    %1400 = vmatpush1.xpose.msra.mxu0 0.0
    %1401 = vmatprep.subr.mxu0 0.0
    %1402 = vmatpush1.xpose.msra.mxu0 0.0
    %1403 = vmatprep.subr.mxu0 0.0
    %1404 = vmatpush1.xpose.msra.mxu0 0.0
    %1405 = vmatprep.subr.mxu0 0.0
    %1406 = vmatpush1.xpose.msra.mxu0 0.0
    %1407 = vmatprep.subr.mxu0 0.0
    %1408 = vmatpush1.xpose.msra.mxu0 0.0
    %1409 = vmatprep.subr.mxu0 0.0
    %1410 = vmatpush1.xpose.msra.mxu0 0.0
    %1411 = vmatprep.subr.mxu0 0.0
    %1412 = vmatpush1.xpose.msra.mxu0 0.0
    %1413 = vmatprep.subr.mxu0 0.0
    %1414 = vmatpush1.xpose.msra.mxu0 0.0
    %1415 = vmatprep.subr.mxu0 0.0
    %1416 = vmatpush1.xpose.msra.mxu0 0.0
    %1417 = vmatprep.subr.mxu0 0.0
    %1418 = vmatpush1.xpose.msra.mxu0 0.0
    %1419 = vmatprep.subr.mxu0 0.0
    %1420 = vmatpush1.xpose.msra.mxu0 0.0
    %1421 = vmatprep.subr.mxu0 0.0
    %1422 = vmatpush1.xpose.msra.mxu0 0.0
    %1423 = vmatprep.mubr.f32.mxu0 0.0
    %1424 = vmatmul.mubr.f32.gmra.mrb[0].mxu0 %v1355
    %v1425 = vpop.f32.mrb[0].mxu0
    %v1426 = vadd.f32 0.0, %v1425
    %v1427 = vpop.f32.mrb[0].mxu0
    %1428 = vdwg.mxu0
    %v1429 = vmul.f32 %v1426, 0.35355338
    %v1430 = vadd.f32 %v1429, %v152
    %v1431 = vsel %vm156, %v1430, -inf
    %1432 = vmax.xlane.f32.xlu0 %v1431
    %v1433 = vpop.xlane.xlu0 %1432
    %v1434 = vsub.f32 %v1430, %v1433
    %v1435 = vmul.f32 %v1434, 1.442695
    %v1436 = vpow.pop %v1435
    %v1437 = vsel %vm156, %v1436, 0.0
    %1438 = vadd.xlane.f32.xlu0 %v1437
    %v1439 = vpop.xlane.xlu0 %1438
    %v1440 = vrcp.pop %v1439
    %v1441 = vmul.f32 %v1436, %v1440
    %1442 = vrot.lane.b32.xlu0 %v144, 40
    %v1443 = vpop.permute.xlu0 %1442
    %v1446 = vsel %vm156, %v1441, 0
    %1448 = vmatprep.subr.mxu0 0.0
    %1449 = vmatpush1.msra.mxu0 %v1443
    %1450 = vmatprep.subr.mxu0 0.0
    %1451 = vmatpush1.msra.mxu0 0.0
    %1452 = vmatprep.subr.mxu0 0.0
    %1453 = vmatpush1.msra.mxu0 0.0
    %1454 = vmatprep.subr.mxu0 0.0
    %1455 = vmatpush1.msra.mxu0 0.0
    %1456 = vmatprep.subr.mxu0 0.0
    %1457 = vmatpush1.msra.mxu0 0.0
    %1458 = vmatprep.subr.mxu0 0.0
    %1459 = vmatpush1.msra.mxu0 0.0
    %1460 = vmatprep.subr.mxu0 0.0
    %1461 = vmatpush1.msra.mxu0 0.0
    %1462 = vmatprep.subr.mxu0 0.0
    %1463 = vmatpush1.msra.mxu0 0.0
    %1464 = vmatprep.subr.mxu0 0.0
    %1465 = vmatpush1.msra.mxu0 0.0
    %1466 = vmatprep.subr.mxu0 0.0
    %1467 = vmatpush1.msra.mxu0 0.0
    %1468 = vmatprep.subr.mxu0 0.0
    %1469 = vmatpush1.msra.mxu0 0.0
    %1470 = vmatprep.subr.mxu0 0.0
    %1471 = vmatpush1.msra.mxu0 0.0
    %1472 = vmatprep.subr.mxu0 0.0
    %1473 = vmatpush1.msra.mxu0 0.0
    %1474 = vmatprep.subr.mxu0 0.0
    %1475 = vmatpush1.msra.mxu0 0.0
    %1476 = vmatprep.subr.mxu0 0.0
    %1477 = vmatpush1.msra.mxu0 0.0
    %1478 = vmatprep.subr.mxu0 0.0
    %1479 = vmatpush1.msra.mxu0 0.0
    %1480 = vmatprep.subr.mxu0 0.0
    %1481 = vmatpush1.msra.mxu0 0.0
    %1482 = vmatprep.subr.mxu0 0.0
    %1483 = vmatpush1.msra.mxu0 0.0
    %1484 = vmatprep.subr.mxu0 0.0
    %1485 = vmatpush1.msra.mxu0 0.0
    %1486 = vmatprep.subr.mxu0 0.0
    %1487 = vmatpush1.msra.mxu0 0.0
    %1488 = vmatprep.subr.mxu0 0.0
    %1489 = vmatpush1.msra.mxu0 0.0
    %1490 = vmatprep.subr.mxu0 0.0
    %1491 = vmatpush1.msra.mxu0 0.0
    %1492 = vmatprep.subr.mxu0 0.0
    %1493 = vmatpush1.msra.mxu0 0.0
    %1494 = vmatprep.subr.mxu0 0.0
    %1495 = vmatpush1.msra.mxu0 0.0
    %1496 = vmatprep.subr.mxu0 0.0
    %1497 = vmatpush1.msra.mxu0 0.0
    %1498 = vmatprep.subr.mxu0 0.0
    %1499 = vmatpush1.msra.mxu0 0.0
    %1500 = vmatprep.subr.mxu0 0.0
    %1501 = vmatpush1.msra.mxu0 0.0
    %1502 = vmatprep.subr.mxu0 0.0
    %1503 = vmatpush1.msra.mxu0 0.0
    %1504 = vmatprep.subr.mxu0 0.0
    %1505 = vmatpush1.msra.mxu0 0.0
    %1506 = vmatprep.subr.mxu0 0.0
    %1507 = vmatpush1.msra.mxu0 0.0
    %1508 = vmatprep.subr.mxu0 0.0
    %1509 = vmatpush1.msra.mxu0 0.0
    %1510 = vmatprep.subr.mxu0 0.0
    %1511 = vmatpush1.msra.mxu0 0.0
    %1512 = vmatprep.mubr.f32.mxu0 0.0
    %1513 = vmatmul.mubr.f32.gmra.mrb[0].mxu0 %v1446
    %v1514 = vpop.f32.mrb[0].mxu0
    %v1515 = vadd.f32 0.0, %v1514
    %v1516 = vpop.f32.mrb[0].mxu0
    %1517 = vdwg.mxu0
    %1519 = vrot.lane.b32.xlu0 %v1515, 24
    %v1520 = vpop.permute.xlu0 %1519
    %1522 = vst.msk [vmem:[#allocation2 + $0x8] sm:$0xff] %vm838, %v1520
    %v1523 = vld [vmem:[#allocation2] sm:$0xff]
    %v1524 = vld [vmem:[#allocation2 + $0x8] sm:$0xff]
    %v1525 = vld [vmem:[#allocation8] sm:$0xff]
    %v1526 = vld [vmem:[#allocation8 + $0x8] sm:$0xff]
    %v1527 = vld [vmem:[#allocation8 + $0x10] sm:$0xff]
    %v1528 = vld [vmem:[#allocation8 + $0x18] sm:$0xff]
    %v1529 = vld [vmem:[%s3] sm:$0x1]
    %v1531 = vlaneseq
    %v1532 = vshrl.u32 %v1531, 7
    %v1533 = vsub.s32 0, %v1532
    %v1534 = vrot.slane %v1529, %v1533
    %v1537 = vsel %vm65, %v1523, 0
    %v1540 = vsel %vm65, %v1524, 0
    %1542 = vmatprep.subr.mxu0 0.0
    %1543 = vmatpush1.msra.mxu0 %v1525
    %1544 = vmatprep.subr.mxu0 0.0
    %1545 = vmatpush1.msra.mxu0 %v1526
    %1546 = vmatprep.subr.mxu0 0.0
    %1547 = vmatpush1.msra.mxu0 %v1527
    %1548 = vmatprep.subr.mxu0 0.0
    %1549 = vmatpush1.msra.mxu0 %v1528
    %1550 = vmatprep.subr.mxu0 0.0
    %1551 = vmatpush1.msra.mxu0 0.0
    %1552 = vmatprep.subr.mxu0 0.0
    %1553 = vmatpush1.msra.mxu0 0.0
    %1554 = vmatprep.subr.mxu0 0.0
    %1555 = vmatpush1.msra.mxu0 0.0
    %1556 = vmatprep.subr.mxu0 0.0
    %1557 = vmatpush1.msra.mxu0 0.0
    %1558 = vmatprep.subr.mxu0 0.0
    %1559 = vmatpush1.msra.mxu0 0.0
    %1560 = vmatprep.subr.mxu0 0.0
    %1561 = vmatpush1.msra.mxu0 0.0
    %1562 = vmatprep.subr.mxu0 0.0
    %1563 = vmatpush1.msra.mxu0 0.0
    %1564 = vmatprep.subr.mxu0 0.0
    %1565 = vmatpush1.msra.mxu0 0.0
    %1566 = vmatprep.subr.mxu0 0.0
    %1567 = vmatpush1.msra.mxu0 0.0
    %1568 = vmatprep.subr.mxu0 0.0
    %1569 = vmatpush1.msra.mxu0 0.0
    %1570 = vmatprep.subr.mxu0 0.0
    %1571 = vmatpush1.msra.mxu0 0.0
    %1572 = vmatprep.subr.mxu0 0.0
    %1573 = vmatpush1.msra.mxu0 0.0
    %1574 = vmatprep.subr.mxu0 0.0
    %1575 = vmatpush1.msra.mxu0 0.0
    %1576 = vmatprep.subr.mxu0 0.0
    %1577 = vmatpush1.msra.mxu0 0.0
    %1578 = vmatprep.subr.mxu0 0.0
    %1579 = vmatpush1.msra.mxu0 0.0
    %1580 = vmatprep.subr.mxu0 0.0
    %1581 = vmatpush1.msra.mxu0 0.0
    %1582 = vmatprep.subr.mxu0 0.0
    %1583 = vmatpush1.msra.mxu0 0.0
    %1584 = vmatprep.subr.mxu0 0.0
    %1585 = vmatpush1.msra.mxu0 0.0
    %1586 = vmatprep.subr.mxu0 0.0
    %1587 = vmatpush1.msra.mxu0 0.0
    %1588 = vmatprep.subr.mxu0 0.0
    %1589 = vmatpush1.msra.mxu0 0.0
    %1590 = vmatprep.subr.mxu0 0.0
    %1591 = vmatpush1.msra.mxu0 0.0
    %1592 = vmatprep.subr.mxu0 0.0
    %1593 = vmatpush1.msra.mxu0 0.0
    %1594 = vmatprep.subr.mxu0 0.0
    %1595 = vmatpush1.msra.mxu0 0.0
    %1596 = vmatprep.subr.mxu0 0.0
    %1597 = vmatpush1.msra.mxu0 0.0
    %1598 = vmatprep.subr.mxu0 0.0
    %1599 = vmatpush1.msra.mxu0 0.0
    %1600 = vmatprep.subr.mxu0 0.0
    %1601 = vmatpush1.msra.mxu0 0.0
    %1602 = vmatprep.subr.mxu0 0.0
    %1603 = vmatpush1.msra.mxu0 0.0
    %1604 = vmatprep.subr.mxu0 0.0
    %1605 = vmatpush1.msra.mxu0 0.0
    %1606 = vmatprep.mubr.f32.mxu0 0.0
    %1607 = vmatmul.mubr.f32.gmra.mrb[0].mxu0 %v1537
    %v1608 = vpop.f32.mrb[0].mxu0
    %v1609 = vadd.f32 %v1534, %v1608
    %v1610 = vpop.f32.mrb[0].mxu0
    %1611 = vmatprep.mubr.f32.mxu0 0.0
    %1612 = vmatmul.mubr.f32.gmra.mrb[0].mxu0 %v1540
    %v1613 = vpop.f32.mrb[0].mxu0
    %v1614 = vadd.f32 %v1534, %v1613
    %v1615 = vpop.f32.mrb[0].mxu0
    %1616 = vdwg.mxu0
    %1617 = vst.msk [vmem:[#allocation9] sm:$0xff] %vm65, %v1609
    %1618 = vst.msk [vmem:[#allocation9 + $0x8] sm:$0xff] %vm65, %v1614
    // Predicated region
    $region30: #{tpu_custom_call.1} parent=1 // pred_check
      _
    $region31: #{tpu_custom_call.1} parent=1 // pred_check_branch
      %1620 = sbr.rel (0) target = $region33
    $region32: #{tpu_custom_call.1} parent=1 // pred_region
      %s1622 = ssub.s32 256, 256
      %1623 = vsyncadd [#allocation5], %s1622
      %s1624 = sshll.u32 [#allocation9], 4
      %s1625 = int_to_ptr.vmem [resolvable:$true] %s1624
      %1630 = dma.vmem_to_hbm [thread:$0]  %s1625, 256, %s4, [#allocation5], 128, 128, 8
    $region33: #{tpu_custom_call.1} parent=1 // pred_fallthru
      _
    // Predicated region
    $region34: #{tpu_custom_call.1} parent=1 // pred_check
      _
    $region35: #{tpu_custom_call.1} parent=1 // pred_check_branch
      %1632 = sbr.rel (0) target = $region37
    $region36: #{tpu_custom_call.1} parent=1 // pred_region
      %1633 = dma.done [#allocation5], 256
    $region37: #{tpu_custom_call.1} parent=1 // pred_fallthru
      _
    %1634 = vsyncpa [#allocation4], 1
    %1635 = vsyncpa [#allocation7], 1
    %1636 = vsyncpa [#allocation5], 1

</llo_original>
